<compile_context>
chip_gen: v5e
topology: v5e:2x2
jax: 0.10.0
libtpu: 0.0.40
codegen_flags: <defaults>
</compile_context>

<pallas_src>
import math
import jax
import jax.numpy as jnp
from jax.experimental import pallas as pl
from jax.experimental.pallas import tpu as pltpu


# ----------------------------------------------------------------------------
# Fused kernel: full BERT encoder + pooler + ae_encoder + classifier heads
# ----------------------------------------------------------------------------
def make_fused_bert_kernel(B, S, H, nH, L):
    hd = H // nH
    scale = 1.0 / math.sqrt(hd)
    BS = B * S
    WDT = jnp.bfloat16   # streamed-weight / matmul-input dtype (f32 accumulate)

    def ln(x, g, b):
        # f32 layernorm (mean/var/rsqrt kept in f32: v5e-safe)
        mu = jnp.mean(x, axis=-1, keepdims=True)
        var = jnp.mean((x - mu) ** 2, axis=-1, keepdims=True)
        return (x - mu) * jax.lax.rsqrt(var + 1e-12) * g + b

    def kernel(x0_ref, mask_ref,
               qkvw_ref, qkvb_ref, ow_ref, ob_ref, l1g_ref, l1b_ref,
               f1w_ref, f1b_ref, f2w_ref, f2b_ref, l2g_ref, l2b_ref,
               pw_ref, pb_ref, aw_ref, ab_ref, hw_ref, hb_ref,
               z_ref, ho_ref, x_scr):
        l = pl.program_id(0)

        # Initialize the single VMEM-resident carry from the (post-emb-LN)
        # embedding activation on the first grid step.
        @pl.when(l == 0)
        def _():
            x_scr[...] = x0_ref[...]

        x = x_scr[...]                                           # [BS, H] f32

        # Fused QKV projection (bf16 weights, f32 accumulate, lane-dense out).
        qkv = (jnp.dot(x.astype(WDT), qkvw_ref[0],
                       preferred_element_type=jnp.float32) + qkvb_ref[0])

        # Additive padding mask, broadcast hoisted out of the head loop.
        mask_b = mask_ref[...][:, None, :]                       # [B, 1, S]

        # Static unrolled loop over heads; per-head contexts are concatenated
        # lane-wise so the output projection is ONE [BS,H]@[H,H] matmul.
        ctxs = []
        for h in range(nH):
            qh = qkv[:, h * hd:(h + 1) * hd].reshape(B, S, hd).astype(WDT)
            kh = qkv[:, H + h * hd:H + (h + 1) * hd].reshape(B, S, hd).astype(WDT)
            vh = qkv[:, 2 * H + h * hd:2 * H + (h + 1) * hd].reshape(B, S, hd).astype(WDT)
            s = (jnp.einsum("bqd,bkd->bqk", qh, kh,
                            preferred_element_type=jnp.float32) * scale + mask_b)
            s = s - jnp.max(s, axis=-1, keepdims=True)
            p = jnp.exp(s)
            p = p * pl.reciprocal(jnp.sum(p, axis=-1, keepdims=True),
                                  approx=True)
            ch = jnp.einsum("bqk,bkd->bqd", p.astype(WDT), vh,
                            preferred_element_type=jnp.float32)
            ctxs.append(ch.reshape(BS, hd))
        ctx = jnp.concatenate(ctxs, axis=-1)                     # [BS, H]
        attn = (jnp.dot(ctx.astype(WDT), ow_ref[0],
                        preferred_element_type=jnp.float32) + ob_ref[0])

        # Fused residual + layernorm.
        x = ln(x + attn, l1g_ref[0], l1b_ref[0])

        # FFN (bf16 weights) with fused bias+gelu, fused residual + layernorm.
        h1 = (jnp.dot(x.astype(WDT), f1w_ref[0],
                      preferred_element_type=jnp.float32) + f1b_ref[0])
        # TODO(synk): HF BERT default gelu is the exact erf form; tanh
        #   approximation used here (safe Mosaic lowering, tiny drift).
        h1 = jax.nn.gelu(h1, approximate=True)
        ff = (jnp.dot(h1.astype(WDT), f2w_ref[0],
                      preferred_element_type=jnp.float32) + f2b_ref[0])
        x = ln(x + ff, l2g_ref[0], l2b_ref[0])

        x_scr[...] = x          # single carry store per step (VMEM-resident)

        # Pooler + ae_encoder + fused classifier heads on the LAST step only.
        @pl.when(l == L - 1)
        def _():
            # First-token rows of the resident activation: strided sublane read.
            first = x_scr[pl.ds(0, B, stride=S), :]              # [B, H]
            pooled = jnp.tanh(jnp.dot(first, pw_ref[...],
                                      preferred_element_type=jnp.float32)
                              + pb_ref[...])
            z = (jnp.dot(pooled, aw_ref[...],
                         preferred_element_type=jnp.float32) + ab_ref[...])
            z_ref[...] = z                                       # [B, Zp]
            ho_ref[...] = (jnp.dot(z, hw_ref[...],
                                   preferred_element_type=jnp.float32)
                           + hb_ref[...])                        # [B, Np]

    return kernel


def bert_fused_pallas(enc, head, x0, mask_add, cfg):
    B, S = mask_add.shape
    BS, H = x0.shape
    L = cfg.num_layers
    I = cfg.intermediate_size
    nH = cfg.num_heads
    ZP = head["ae_w"].shape[1]       # 128-padded ae_z_size
    NP = head["heads_w"].shape[1]    # 128-padded fused-heads width

    full = lambda shp: pl.BlockSpec(shp, lambda l: (0,) * len(shp))
    per_layer = lambda shp: pl.BlockSpec((1,) + shp, lambda l: (l, 0, 0))

    grid_spec = pltpu.PrefetchScalarGridSpec(
        num_scalar_prefetch=0,
        grid=(L,),
        in_specs=[
            full((BS, H)),            # x0 (post-emb-LN)
            full((B, S)),             # additive attention mask
            per_layer((H, 3 * H)),    # qkv_w  (bf16)
            per_layer((1, 3 * H)),    # qkv_b
            per_layer((H, H)),        # o_w    (bf16)
            per_layer((1, H)),        # o_b
            per_layer((1, H)),        # ln1_g
            per_layer((1, H)),        # ln1_b
            per_layer((H, I)),        # ffn1_w (bf16)
            per_layer((1, I)),        # ffn1_b
            per_layer((I, H)),        # ffn2_w (bf16)
            per_layer((1, H)),        # ffn2_b
            per_layer((1, H)),        # ln2_g
            per_layer((1, H)),        # ln2_b
            full((H, H)),             # pooler_w
            full((1, H)),             # pooler_b
            full((H, ZP)),            # ae_w   (zero-padded)
            full((1, ZP)),            # ae_b
            full((ZP, NP)),           # heads_w (fused, zero-padded)
            full((1, NP)),            # heads_b
        ],
        out_specs=[pl.BlockSpec((B, ZP), lambda l: (0, 0)),
                   pl.BlockSpec((B, NP), lambda l: (0, 0))],
        scratch_shapes=[pltpu.VMEM((BS, H), jnp.float32)],
    )
    return pl.pallas_call(
        make_fused_bert_kernel(B, S, H, nH, L),
        out_shape=(jax.ShapeDtypeStruct((B, ZP), jnp.float32),
                   jax.ShapeDtypeStruct((B, NP), jnp.float32)),
        grid_spec=grid_spec,
        compiler_params=pltpu.CompilerParams(
            dimension_semantics=("arbitrary",),      # sequential layer carry
            vmem_limit_bytes=32 * 1024 * 1024),      # explicit (> 16 MiB v5e default)
    )(x0, mask_add,
      enc["qkv_w"], enc["qkv_b"], enc["o_w"], enc["o_b"],
      enc["ln1_g"], enc["ln1_b"], enc["f1_w"], enc["f1_b"],
      enc["f2_w"], enc["f2_b"], enc["ln2_g"], enc["ln2_b"],
      head["pooler_w"], head["pooler_b"], head["ae_w"], head["ae_b"],
      head["heads_w"], head["heads_b"])


# ----------------------------------------------------------------------------
# Params: deterministic random-init BERT + heads, then packed / stacked
# ----------------------------------------------------------------------------
class Config:
    vocab_size = 100
    type_vocab_size = 2
    max_position = 16
    hidden_size = 32
    num_layers = 2
    num_heads = 4
    intermediate_size = 64


def _round_up(n, m):
    return ((n + m - 1) // m) * m


def _layernorm(x, g, b, eps=1e-12):
    mu = jnp.mean(x, axis=-1, keepdims=True)
    var = jnp.mean((x - mu) ** 2, axis=-1, keepdims=True)
    return (x - mu) * jax.lax.rsqrt(var + eps) * g + b


def init_params(key, cfg, ae_z_size, z_split_first_size, cls_num):
    ks = iter(jax.random.split(key, 128))

    def dense(k, fan_in, fan_out):
        kw, kb = jax.random.split(k)
        w = jax.random.normal(kw, (fan_in, fan_out), jnp.float32) * 0.02
        b = jax.random.normal(kb, (fan_out,), jnp.float32) * 0.02
        return {"w": w, "b": b}

    p = {
        "word_emb": jax.random.normal(next(ks), (cfg.vocab_size, cfg.hidden_size)) * 0.02,
        "pos_emb": jax.random.normal(next(ks), (cfg.max_position, cfg.hidden_size)) * 0.02,
        "type_emb": jax.random.normal(next(ks), (cfg.type_vocab_size, cfg.hidden_size)) * 0.02,
        "emb_ln_g": jnp.ones((cfg.hidden_size,), jnp.float32),
        "emb_ln_b": jnp.zeros((cfg.hidden_size,), jnp.float32),
        "layers": [],
        "pooler": dense(next(ks), cfg.hidden_size, cfg.hidden_size),
        "ae_encoder": dense(next(ks), cfg.hidden_size, ae_z_size),
        "fc_fx": dense(next(ks), ae_z_size, cls_num),
        "fc_z1": dense(next(ks), z_split_first_size, 1),
        "fc_z2": dense(next(ks), ae_z_size - z_split_first_size, z_split_first_size),
        "fc_pd4mz1": dense(next(ks), z_split_first_size, cls_num),
        "fc_pd4mz2": dense(next(ks), ae_z_size - z_split_first_size, cls_num),
    }
    for _ in range(cfg.num_layers):
        p["layers"].append({
            "q": dense(next(ks), cfg.hidden_size, cfg.hidden_size),
            "k": dense(next(ks), cfg.hidden_size, cfg.hidden_size),
            "v": dense(next(ks), cfg.hidden_size, cfg.hidden_size),
            "o": dense(next(ks), cfg.hidden_size, cfg.hidden_size),
            "attn_ln_g": jnp.ones((cfg.hidden_size,), jnp.float32),
            "attn_ln_b": jnp.zeros((cfg.hidden_size,), jnp.float32),
            "ffn1": dense(next(ks), cfg.hidden_size, cfg.intermediate_size),
            "ffn2": dense(next(ks), cfg.intermediate_size, cfg.hidden_size),
            "ffn_ln_g": jnp.ones((cfg.hidden_size,), jnp.float32),
            "ffn_ln_b": jnp.zeros((cfg.hidden_size,), jnp.float32),
        })
    return p


def pack_params(p, cfg, ae_z_size, zs, cls_num):
    """Stack per-layer weights to [L,...] bf16, fuse QKV, pad+fuse head matmuls."""
    H = cfg.hidden_size
    wdt = jnp.bfloat16

    def stack(fn):
        return jnp.stack([fn(lp) for lp in p["layers"]], axis=0)

    enc = {
        "word_emb": p["word_emb"], "pos_emb": p["pos_emb"], "type_emb": p["type_emb"],
        "emb_ln_g": p["emb_ln_g"], "emb_ln_b": p["emb_ln_b"],   # used in XLA glue
        "qkv_w": stack(lambda lp: jnp.concatenate(
            [lp["q"]["w"], lp["k"]["w"], lp["v"]["w"]], axis=1)).astype(wdt),   # [L,H,3H]
        "qkv_b": stack(lambda lp: jnp.concatenate(
            [lp["q"]["b"], lp["k"]["b"], lp["v"]["b"]])[None, :]),              # [L,1,3H]
        "o_w": stack(lambda lp: lp["o"]["w"]).astype(wdt),
        "o_b": stack(lambda lp: lp["o"]["b"][None, :]),
        "ln1_g": stack(lambda lp: lp["attn_ln_g"][None, :]),
        "ln1_b": stack(lambda lp: lp["attn_ln_b"][None, :]),
        "f1_w": stack(lambda lp: lp["ffn1"]["w"]).astype(wdt),
        "f1_b": stack(lambda lp: lp["ffn1"]["b"][None, :]),
        "f2_w": stack(lambda lp: lp["ffn2"]["w"]).astype(wdt),
        "f2_b": stack(lambda lp: lp["ffn2"]["b"][None, :]),
        "ln2_g": stack(lambda lp: lp["ffn_ln_g"][None, :]),
        "ln2_b": stack(lambda lp: lp["ffn_ln_b"][None, :]),
    }

    # Fuse the five tiny head projections into one [Z, NT] matmul from z,
    # zero-padding rows so the z1-only / z2-only heads stay exact, then pad
    # everything out to lane-dense (multiple-of-128) shapes.
    Z, z2s, cls = ae_z_size, ae_z_size - zs, cls_num
    NT = cls + 1 + zs + cls + cls
    ZP = _round_up(Z, 128)
    NP = _round_up(NT, 128)

    f32z = lambda r, c: jnp.zeros((r, c), jnp.float32)
    W_fx = p["fc_fx"]["w"]                                                  # [Z, cls]
    W_z1 = jnp.concatenate([p["fc_z1"]["w"], f32z(z2s, 1)], axis=0)         # [Z, 1]
    W_z2 = jnp.concatenate([f32z(zs, zs), p["fc_z2"]["w"]], axis=0)         # [Z, zs]
    W_p1 = jnp.concatenate([p["fc_pd4mz1"]["w"], f32z(z2s, cls)], axis=0)   # [Z, cls]
    W_p2 = jnp.concatenate([f32z(zs, cls), p["fc_pd4mz2"]["w"]], axis=0)    # [Z, cls]
    heads_w = jnp.concatenate([W_fx, W_z1, W_z2, W_p1, W_p2], axis=1)       # [Z, NT]
    heads_b = jnp.concatenate([p["fc_fx"]["b"], p["fc_z1"]["b"], p["fc_z2"]["b"],
                               p["fc_pd4mz1"]["b"], p["fc_pd4mz2"]["b"]])    # [NT]

    ae_w_p = jnp.zeros((H, ZP), jnp.float32).at[:, :Z].set(p["ae_encoder"]["w"])
    ae_b_p = jnp.zeros((1, ZP), jnp.float32).at[0, :Z].set(p["ae_encoder"]["b"])
    heads_w_p = jnp.zeros((ZP, NP), jnp.float32).at[:Z, :NT].set(heads_w)
    heads_b_p = jnp.zeros((1, NP), jnp.float32).at[0, :NT].set(heads_b)

    head = {
        "pooler_w": p["pooler"]["w"], "pooler_b": p["pooler"]["b"][None, :],
        "ae_w": ae_w_p, "ae_b": ae_b_p,
        "heads_w": heads_w_p, "heads_b": heads_b_p,
    }
    return enc, head


# ----------------------------------------------------------------------------
# Forward
# ----------------------------------------------------------------------------
def my_auto_model_forward(enc, head, cfg, ae_z_size, zs, cls_num,
                          input_ids, attention_mask=None, token_type_ids=None):
    B, S = input_ids.shape
    H = cfg.hidden_size
    if attention_mask is None:
        attention_mask = jnp.ones((B, S), jnp.int32)
    if token_type_ids is None:
        token_type_ids = jnp.zeros((B, S), jnp.int32)

    # Embedding gathers + embedding layernorm stay in XLA glue (memory-bound).
    pos = jnp.arange(S, dtype=jnp.int32)
    x0 = (jnp.take(enc["word_emb"], input_ids, axis=0)
          + jnp.take(enc["pos_emb"], pos, axis=0)[None, :, :]
          + jnp.take(enc["type_emb"], token_type_ids, axis=0)).reshape(B * S, H)
    x0 = _layernorm(x0, enc["emb_ln_g"], enc["emb_ln_b"])
    mask_add = (1.0 - attention_mask.astype(jnp.float32)) * -1e9            # [B, S]

    # Single fused pallas_call: encoder + pooler + ae + classifier heads.
    z_pad, heads_pad = bert_fused_pallas(enc, head, x0, mask_add, cfg)

    Z = ae_z_size
    cls = cls_num
    NT = cls + 1 + zs + cls + cls
    z = z_pad[:, :Z]
    heads = heads_pad[:, :NT]

    o_fx = heads[:, 0:cls]
    o_z1 = heads[:, cls:cls + 1]
    o_z2 = heads[:, cls + 1:cls + 1 + zs]
    pd4mz1 = heads[:, cls + 1 + zs:cls + 1 + zs + cls]
    pd4mz2 = heads[:, cls + 1 + zs + cls:cls + 1 + zs + 2 * cls]

    # TODO(synk): forward-value dedup of the stop_gradient branches
    #   (z_bert_detached == z, output_z2_detached == output_z2_fc in value);
    #   for a training graph the duplicate matmuls must be restored to keep
    #   the original gradient wiring.
    z1_nobert = jax.lax.stop_gradient(z[:, :zs])
    nodetach_z2 = z[:, zs:]
    output_z2_detached = jax.lax.stop_gradient(o_z2)

    return (o_fx, o_z1, o_z2, z1_nobert, output_z2_detached,
            nodetach_z2, pd4mz1, pd4mz2)


# ----------------------------------------------------------------------------
if __name__ == "__main__":
    cfg = Config()
    ae_z_size = 16
    z_split_first_size = 8
    cls_num = 3

    key = jax.random.PRNGKey(0)
    kp, kid = jax.random.split(key)
    raw_params = init_params(kp, cfg, ae_z_size, z_split_first_size, cls_num)
    enc, head = pack_params(raw_params, cfg, ae_z_size, z_split_first_size, cls_num)

    B, S = 2, 8
    input_ids = jax.random.randint(kid, (B, S), 0, cfg.vocab_size, dtype=jnp.int32)
    attention_mask = jnp.ones((B, S), jnp.int32)
    token_type_ids = jnp.zeros((B, S), jnp.int32)

    fwd = jax.jit(lambda ids, am, tt: my_auto_model_forward(
        enc, head, cfg, ae_z_size, z_split_first_size, cls_num, ids, am, tt))
    outs = jax.block_until_ready(fwd(input_ids, attention_mask, token_type_ids))

    expected_shapes = [(B, cls_num), (B, 1), (B, z_split_first_size),
                       (B, z_split_first_size), (B, z_split_first_size),
                       (B, ae_z_size - z_split_first_size),
                       (B, cls_num), (B, cls_num)]
    assert len(outs) == 8
    for o, es in zip(outs, expected_shapes):
        assert o.shape == es, (o.shape, es)
        assert bool(jnp.all(jnp.isfinite(o)))

    print("KERNEL_OK")
</pallas_src>

<mosaic_0001>
module attributes {stable_mosaic.version = 11 : i64} {
  func.func @kernel(%arg0: i32, %arg1: memref<16x32xf32, #tpu.memory_space<vmem>>, %arg2: memref<2x8xf32, #tpu.memory_space<vmem>>, %arg3: memref<1x32x96xbf16, #tpu.memory_space<vmem>>, %arg4: memref<1x1x96xf32, #tpu.memory_space<vmem>>, %arg5: memref<1x32x32xbf16, #tpu.memory_space<vmem>>, %arg6: memref<1x1x32xf32, #tpu.memory_space<vmem>>, %arg7: memref<1x1x32xf32, #tpu.memory_space<vmem>>, %arg8: memref<1x1x32xf32, #tpu.memory_space<vmem>>, %arg9: memref<1x32x64xbf16, #tpu.memory_space<vmem>>, %arg10: memref<1x1x64xf32, #tpu.memory_space<vmem>>, %arg11: memref<1x64x32xbf16, #tpu.memory_space<vmem>>, %arg12: memref<1x1x32xf32, #tpu.memory_space<vmem>>, %arg13: memref<1x1x32xf32, #tpu.memory_space<vmem>>, %arg14: memref<1x1x32xf32, #tpu.memory_space<vmem>>, %arg15: memref<32x32xf32, #tpu.memory_space<vmem>>, %arg16: memref<1x32xf32, #tpu.memory_space<vmem>>, %arg17: memref<32x128xf32, #tpu.memory_space<vmem>>, %arg18: memref<1x128xf32, #tpu.memory_space<vmem>>, %arg19: memref<128x128xf32, #tpu.memory_space<vmem>>, %arg20: memref<1x128xf32, #tpu.memory_space<vmem>>, %arg21: memref<2x128xf32, #tpu.memory_space<vmem>>, %arg22: memref<2x128xf32, #tpu.memory_space<vmem>>, %arg23: memref<16x32xf32, #tpu.memory_space<vmem>>) attributes {dimension_semantics = [#tpu.dimension_semantics<arbitrary>], iteration_bounds = array<i64: 2>, scalar_prefetch = 0 : i64, scratch_operands = 1 : i64, tpu.core_type = #tpu.core_type<tc>, window_params = [{pipeline_mode = #tpu.pipeline_mode<synchronous>, transform_indices = @transform_0, window_bounds = array<i64: 16, 32>}, {pipeline_mode = #tpu.pipeline_mode<synchronous>, transform_indices = @transform_1, window_bounds = array<i64: 2, 8>}, {transform_indices = @transform_2, window_bounds = array<i64: 1, 32, 96>}, {transform_indices = @transform_3, window_bounds = array<i64: 1, 1, 96>}, {transform_indices = @transform_4, window_bounds = array<i64: 1, 32, 32>}, {transform_indices = @transform_5, window_bounds = array<i64: 1, 1, 32>}, {transform_indices = @transform_6, window_bounds = array<i64: 1, 1, 32>}, {transform_indices = @transform_7, window_bounds = array<i64: 1, 1, 32>}, {transform_indices = @transform_8, window_bounds = array<i64: 1, 32, 64>}, {transform_indices = @transform_9, window_bounds = array<i64: 1, 1, 64>}, {transform_indices = @transform_10, window_bounds = array<i64: 1, 64, 32>}, {transform_indices = @transform_11, window_bounds = array<i64: 1, 1, 32>}, {transform_indices = @transform_12, window_bounds = array<i64: 1, 1, 32>}, {transform_indices = @transform_13, window_bounds = array<i64: 1, 1, 32>}, {pipeline_mode = #tpu.pipeline_mode<synchronous>, transform_indices = @transform_14, window_bounds = array<i64: 32, 32>}, {pipeline_mode = #tpu.pipeline_mode<synchronous>, transform_indices = @transform_15, window_bounds = array<i64: 1, 32>}, {pipeline_mode = #tpu.pipeline_mode<synchronous>, transform_indices = @transform_16, window_bounds = array<i64: 32, 128>}, {pipeline_mode = #tpu.pipeline_mode<synchronous>, transform_indices = @transform_17, window_bounds = array<i64: 1, 128>}, {pipeline_mode = #tpu.pipeline_mode<synchronous>, transform_indices = @transform_18, window_bounds = array<i64: 128, 128>}, {pipeline_mode = #tpu.pipeline_mode<synchronous>, transform_indices = @transform_19, window_bounds = array<i64: 1, 128>}, {pipeline_mode = #tpu.pipeline_mode<synchronous>, transform_indices = @transform_20, window_bounds = array<i64: 2, 128>}, {pipeline_mode = #tpu.pipeline_mode<synchronous>, transform_indices = @transform_21, window_bounds = array<i64: 2, 128>}]} {
    %c0_i32 = arith.constant 0 : i32
    %0 = arith.cmpi eq, %arg0, %c0_i32 : i32
    %1 = arith.extui %0 : i1 to i32
    %c0_i32_0 = arith.constant 0 : i32
    %2 = arith.cmpi ne, %1, %c0_i32_0 : i32
    scf.if %2 {
      %c0_80 = arith.constant 0 : index
      %c0_81 = arith.constant 0 : index
      %218 = vector.load %arg1[%c0_80, %c0_81] : memref<16x32xf32, #tpu.memory_space<vmem>>, vector<16x32xf32>
      %c0_82 = arith.constant 0 : index
      %c0_83 = arith.constant 0 : index
      %219 = vector.load %arg23[%c0_82, %c0_83] : memref<16x32xf32, #tpu.memory_space<vmem>>, vector<16x32xf32>
      tpu.vector_store %arg23[%c0_82, %c0_83], %218 {strides = array<i32>} : memref<16x32xf32, #tpu.memory_space<vmem>>, vector<16x32xf32>,
    } else {
    }
    %c0 = arith.constant 0 : index
    %c0_1 = arith.constant 0 : index
    %3 = vector.load %arg23[%c0, %c0_1] : memref<16x32xf32, #tpu.memory_space<vmem>>, vector<16x32xf32>
    %4 = arith.truncf %3 : vector<16x32xf32> to vector<16x32xbf16>
    %c0_2 = arith.constant 0 : index
    %c0_3 = arith.constant 0 : index
    %c0_4 = arith.constant 0 : index
    %5 = vector.load %arg3[%c0_2, %c0_3, %c0_4] : memref<1x32x96xbf16, #tpu.memory_space<vmem>>, vector<1x32x96xbf16>
    %6 = vector.shape_cast %5 : vector<1x32x96xbf16> to vector<32x96xbf16>
    %cst = arith.constant dense<0.000000e+00> : vector<16x96xf32>
    %7 = tpu.matmul %4, %6, %cst {dimension_numbers = #tpu.dot_dimension_numbers<[1], [0], [0], [1], [0, 0, 1, 1], [], []>} : vector<16x32xbf16>, vector<32x96xbf16>, vector<16x96xf32> -> vector<16x96xf32>
    %c0_5 = arith.constant 0 : index
    %c0_6 = arith.constant 0 : index
    %c0_7 = arith.constant 0 : index
    %8 = vector.load %arg4[%c0_5, %c0_6, %c0_7] : memref<1x1x96xf32, #tpu.memory_space<vmem>>, vector<1x1x96xf32>
    %9 = vector.shape_cast %8 : vector<1x1x96xf32> to vector<1x96xf32>
    %10 = vector.broadcast %9 : vector<1x96xf32> to vector<16x96xf32>
    %11 = arith.addf %7, %10 : vector<16x96xf32>
    %c0_8 = arith.constant 0 : index
    %c0_9 = arith.constant 0 : index
    %12 = vector.load %arg2[%c0_8, %c0_9] : memref<2x8xf32, #tpu.memory_space<vmem>>, vector<2x8xf32>
    %13 = vector.shape_cast %12 : vector<2x8xf32> to vector<2x1x8xf32>
    %14 = vector.extract_strided_slice %11 {offsets = [0, 0], sizes = [16, 8], strides = [1, 1]} : vector<16x96xf32> to vector<16x8xf32>
    %15 = vector.shape_cast %14 : vector<16x8xf32> to vector<2x8x8xf32>
    %16 = arith.truncf %15 : vector<2x8x8xf32> to vector<2x8x8xbf16>
    %17 = vector.extract_strided_slice %11 {offsets = [0, 32], sizes = [16, 8], strides = [1, 1]} : vector<16x96xf32> to vector<16x8xf32>
    %18 = vector.shape_cast %17 : vector<16x8xf32> to vector<2x8x8xf32>
    %19 = arith.truncf %18 : vector<2x8x8xf32> to vector<2x8x8xbf16>
    %20 = vector.extract_strided_slice %11 {offsets = [0, 64], sizes = [16, 8], strides = [1, 1]} : vector<16x96xf32> to vector<16x8xf32>
    %21 = vector.shape_cast %20 : vector<16x8xf32> to vector<2x8x8xf32>
    %22 = arith.truncf %21 : vector<2x8x8xf32> to vector<2x8x8xbf16>
    "tpu.trace_start"() <{level = 10 : i32, message = "bqd,bkd->bqk"}> : () -> ()
    %cst_10 = arith.constant dense<0.000000e+00> : vector<2x8x8xf32>
    %23 = tpu.matmul %16, %19, %cst_10 {dimension_numbers = #tpu.dot_dimension_numbers<[2], [2], [1], [1], [0, 0, 0, 1, 1, 1], [0], [0]>} : vector<2x8x8xbf16>, vector<2x8x8xbf16>, vector<2x8x8xf32> -> vector<2x8x8xf32>
    "tpu.trace_stop"() : () -> ()
    %cst_11 = arith.constant 0.353553385 : f32
    %24 = vector.broadcast %cst_11 : f32 to vector<2x8x8xf32>
    %25 = arith.mulf %23, %24 : vector<2x8x8xf32>
    %26 = vector.broadcast %13 : vector<2x1x8xf32> to vector<2x8x8xf32>
    %27 = arith.addf %25, %26 : vector<2x8x8xf32>
    %cst_12 = arith.constant dense<0xFF800000> : vector<2x8xf32>
    %28 = vector.multi_reduction <maximumf>, %27, %cst_12 [2] : vector<2x8x8xf32> to vector<2x8xf32>
    %29 = vector.shape_cast %28 : vector<2x8xf32> to vector<2x8x1xf32>
    %30 = vector.broadcast %29 : vector<2x8x1xf32> to vector<2x8x8xf32>
    %31 = arith.subf %27, %30 : vector<2x8x8xf32>
    %32 = math.exp %31 : vector<2x8x8xf32>
    %cst_13 = arith.constant dense<0.000000e+00> : vector<2x8xf32>
    %33 = vector.multi_reduction <add>, %32, %cst_13 [2] : vector<2x8x8xf32> to vector<2x8xf32>
    %34 = vector.shape_cast %33 : vector<2x8xf32> to vector<2x8x1xf32>
    %35 = tpu.reciprocal %34 {approx = true} : vector<2x8x1xf32> -> vector<2x8x1xf32>
    %36 = vector.broadcast %35 : vector<2x8x1xf32> to vector<2x8x8xf32>
    %37 = arith.mulf %32, %36 : vector<2x8x8xf32>
    %38 = arith.truncf %37 : vector<2x8x8xf32> to vector<2x8x8xbf16>
    "tpu.trace_start"() <{level = 10 : i32, message = "bqk,bkd->bqd"}> : () -> ()
    %cst_14 = arith.constant dense<0.000000e+00> : vector<2x8x8xf32>
    %39 = tpu.matmul %38, %22, %cst_14 {dimension_numbers = #tpu.dot_dimension_numbers<[2], [1], [1], [2], [0, 0, 0, 1, 1, 2], [0], [0]>} : vector<2x8x8xbf16>, vector<2x8x8xbf16>, vector<2x8x8xf32> -> vector<2x8x8xf32>
    "tpu.trace_stop"() : () -> ()
    %40 = vector.shape_cast %39 : vector<2x8x8xf32> to vector<16x8xf32>
    %41 = vector.extract_strided_slice %11 {offsets = [0, 8], sizes = [16, 8], strides = [1, 1]} : vector<16x96xf32> to vector<16x8xf32>
    %42 = vector.shape_cast %41 : vector<16x8xf32> to vector<2x8x8xf32>
    %43 = arith.truncf %42 : vector<2x8x8xf32> to vector<2x8x8xbf16>
    %44 = vector.extract_strided_slice %11 {offsets = [0, 40], sizes = [16, 8], strides = [1, 1]} : vector<16x96xf32> to vector<16x8xf32>
    %45 = vector.shape_cast %44 : vector<16x8xf32> to vector<2x8x8xf32>
    %46 = arith.truncf %45 : vector<2x8x8xf32> to vector<2x8x8xbf16>
    %47 = vector.extract_strided_slice %11 {offsets = [0, 72], sizes = [16, 8], strides = [1, 1]} : vector<16x96xf32> to vector<16x8xf32>
    %48 = vector.shape_cast %47 : vector<16x8xf32> to vector<2x8x8xf32>
    %49 = arith.truncf %48 : vector<2x8x8xf32> to vector<2x8x8xbf16>
    "tpu.trace_start"() <{level = 10 : i32, message = "bqd,bkd->bqk"}> : () -> ()
    %cst_15 = arith.constant dense<0.000000e+00> : vector<2x8x8xf32>
    %50 = tpu.matmul %43, %46, %cst_15 {dimension_numbers = #tpu.dot_dimension_numbers<[2], [2], [1], [1], [0, 0, 0, 1, 1, 1], [0], [0]>} : vector<2x8x8xbf16>, vector<2x8x8xbf16>, vector<2x8x8xf32> -> vector<2x8x8xf32>
    "tpu.trace_stop"() : () -> ()
    %cst_16 = arith.constant 0.353553385 : f32
    %51 = vector.broadcast %cst_16 : f32 to vector<2x8x8xf32>
    %52 = arith.mulf %50, %51 : vector<2x8x8xf32>
    %53 = vector.broadcast %13 : vector<2x1x8xf32> to vector<2x8x8xf32>
    %54 = arith.addf %52, %53 : vector<2x8x8xf32>
    %cst_17 = arith.constant dense<0xFF800000> : vector<2x8xf32>
    %55 = vector.multi_reduction <maximumf>, %54, %cst_17 [2] : vector<2x8x8xf32> to vector<2x8xf32>
    %56 = vector.shape_cast %55 : vector<2x8xf32> to vector<2x8x1xf32>
    %57 = vector.broadcast %56 : vector<2x8x1xf32> to vector<2x8x8xf32>
    %58 = arith.subf %54, %57 : vector<2x8x8xf32>
    %59 = math.exp %58 : vector<2x8x8xf32>
    %cst_18 = arith.constant dense<0.000000e+00> : vector<2x8xf32>
    %60 = vector.multi_reduction <add>, %59, %cst_18 [2] : vector<2x8x8xf32> to vector<2x8xf32>
    %61 = vector.shape_cast %60 : vector<2x8xf32> to vector<2x8x1xf32>
    %62 = tpu.reciprocal %61 {approx = true} : vector<2x8x1xf32> -> vector<2x8x1xf32>
    %63 = vector.broadcast %62 : vector<2x8x1xf32> to vector<2x8x8xf32>
    %64 = arith.mulf %59, %63 : vector<2x8x8xf32>
    %65 = arith.truncf %64 : vector<2x8x8xf32> to vector<2x8x8xbf16>
    "tpu.trace_start"() <{level = 10 : i32, message = "bqk,bkd->bqd"}> : () -> ()
    %cst_19 = arith.constant dense<0.000000e+00> : vector<2x8x8xf32>
    %66 = tpu.matmul %65, %49, %cst_19 {dimension_numbers = #tpu.dot_dimension_numbers<[2], [1], [1], [2], [0, 0, 0, 1, 1, 2], [0], [0]>} : vector<2x8x8xbf16>, vector<2x8x8xbf16>, vector<2x8x8xf32> -> vector<2x8x8xf32>
    "tpu.trace_stop"() : () -> ()
    %67 = vector.shape_cast %66 : vector<2x8x8xf32> to vector<16x8xf32>
    %68 = vector.extract_strided_slice %11 {offsets = [0, 16], sizes = [16, 8], strides = [1, 1]} : vector<16x96xf32> to vector<16x8xf32>
    %69 = vector.shape_cast %68 : vector<16x8xf32> to vector<2x8x8xf32>
    %70 = arith.truncf %69 : vector<2x8x8xf32> to vector<2x8x8xbf16>
    %71 = vector.extract_strided_slice %11 {offsets = [0, 48], sizes = [16, 8], strides = [1, 1]} : vector<16x96xf32> to vector<16x8xf32>
    %72 = vector.shape_cast %71 : vector<16x8xf32> to vector<2x8x8xf32>
    %73 = arith.truncf %72 : vector<2x8x8xf32> to vector<2x8x8xbf16>
    %74 = vector.extract_strided_slice %11 {offsets = [0, 80], sizes = [16, 8], strides = [1, 1]} : vector<16x96xf32> to vector<16x8xf32>
    %75 = vector.shape_cast %74 : vector<16x8xf32> to vector<2x8x8xf32>
    %76 = arith.truncf %75 : vector<2x8x8xf32> to vector<2x8x8xbf16>
    "tpu.trace_start"() <{level = 10 : i32, message = "bqd,bkd->bqk"}> : () -> ()
    %cst_20 = arith.constant dense<0.000000e+00> : vector<2x8x8xf32>
    %77 = tpu.matmul %70, %73, %cst_20 {dimension_numbers = #tpu.dot_dimension_numbers<[2], [2], [1], [1], [0, 0, 0, 1, 1, 1], [0], [0]>} : vector<2x8x8xbf16>, vector<2x8x8xbf16>, vector<2x8x8xf32> -> vector<2x8x8xf32>
    "tpu.trace_stop"() : () -> ()
    %cst_21 = arith.constant 0.353553385 : f32
    %78 = vector.broadcast %cst_21 : f32 to vector<2x8x8xf32>
    %79 = arith.mulf %77, %78 : vector<2x8x8xf32>
    %80 = vector.broadcast %13 : vector<2x1x8xf32> to vector<2x8x8xf32>
    %81 = arith.addf %79, %80 : vector<2x8x8xf32>
    %cst_22 = arith.constant dense<0xFF800000> : vector<2x8xf32>
    %82 = vector.multi_reduction <maximumf>, %81, %cst_22 [2] : vector<2x8x8xf32> to vector<2x8xf32>
    %83 = vector.shape_cast %82 : vector<2x8xf32> to vector<2x8x1xf32>
    %84 = vector.broadcast %83 : vector<2x8x1xf32> to vector<2x8x8xf32>
    %85 = arith.subf %81, %84 : vector<2x8x8xf32>
    %86 = math.exp %85 : vector<2x8x8xf32>
    %cst_23 = arith.constant dense<0.000000e+00> : vector<2x8xf32>
    %87 = vector.multi_reduction <add>, %86, %cst_23 [2] : vector<2x8x8xf32> to vector<2x8xf32>
    %88 = vector.shape_cast %87 : vector<2x8xf32> to vector<2x8x1xf32>
    %89 = tpu.reciprocal %88 {approx = true} : vector<2x8x1xf32> -> vector<2x8x1xf32>
    %90 = vector.broadcast %89 : vector<2x8x1xf32> to vector<2x8x8xf32>
    %91 = arith.mulf %86, %90 : vector<2x8x8xf32>
    %92 = arith.truncf %91 : vector<2x8x8xf32> to vector<2x8x8xbf16>
    "tpu.trace_start"() <{level = 10 : i32, message = "bqk,bkd->bqd"}> : () -> ()
    %cst_24 = arith.constant dense<0.000000e+00> : vector<2x8x8xf32>
    %93 = tpu.matmul %92, %76, %cst_24 {dimension_numbers = #tpu.dot_dimension_numbers<[2], [1], [1], [2], [0, 0, 0, 1, 1, 2], [0], [0]>} : vector<2x8x8xbf16>, vector<2x8x8xbf16>, vector<2x8x8xf32> -> vector<2x8x8xf32>
    "tpu.trace_stop"() : () -> ()
    %94 = vector.shape_cast %93 : vector<2x8x8xf32> to vector<16x8xf32>
    %95 = vector.extract_strided_slice %11 {offsets = [0, 24], sizes = [16, 8], strides = [1, 1]} : vector<16x96xf32> to vector<16x8xf32>
    %96 = vector.shape_cast %95 : vector<16x8xf32> to vector<2x8x8xf32>
    %97 = arith.truncf %96 : vector<2x8x8xf32> to vector<2x8x8xbf16>
    %98 = vector.extract_strided_slice %11 {offsets = [0, 56], sizes = [16, 8], strides = [1, 1]} : vector<16x96xf32> to vector<16x8xf32>
    %99 = vector.shape_cast %98 : vector<16x8xf32> to vector<2x8x8xf32>
    %100 = arith.truncf %99 : vector<2x8x8xf32> to vector<2x8x8xbf16>
    %101 = vector.extract_strided_slice %11 {offsets = [0, 88], sizes = [16, 8], strides = [1, 1]} : vector<16x96xf32> to vector<16x8xf32>
    %102 = vector.shape_cast %101 : vector<16x8xf32> to vector<2x8x8xf32>
    %103 = arith.truncf %102 : vector<2x8x8xf32> to vector<2x8x8xbf16>
    "tpu.trace_start"() <{level = 10 : i32, message = "bqd,bkd->bqk"}> : () -> ()
    %cst_25 = arith.constant dense<0.000000e+00> : vector<2x8x8xf32>
    %104 = tpu.matmul %97, %100, %cst_25 {dimension_numbers = #tpu.dot_dimension_numbers<[2], [2], [1], [1], [0, 0, 0, 1, 1, 1], [0], [0]>} : vector<2x8x8xbf16>, vector<2x8x8xbf16>, vector<2x8x8xf32> -> vector<2x8x8xf32>
    "tpu.trace_stop"() : () -> ()
    %cst_26 = arith.constant 0.353553385 : f32
    %105 = vector.broadcast %cst_26 : f32 to vector<2x8x8xf32>
    %106 = arith.mulf %104, %105 : vector<2x8x8xf32>
    %107 = vector.broadcast %13 : vector<2x1x8xf32> to vector<2x8x8xf32>
    %108 = arith.addf %106, %107 : vector<2x8x8xf32>
    %cst_27 = arith.constant dense<0xFF800000> : vector<2x8xf32>
    %109 = vector.multi_reduction <maximumf>, %108, %cst_27 [2] : vector<2x8x8xf32> to vector<2x8xf32>
    %110 = vector.shape_cast %109 : vector<2x8xf32> to vector<2x8x1xf32>
    %111 = vector.broadcast %110 : vector<2x8x1xf32> to vector<2x8x8xf32>
    %112 = arith.subf %108, %111 : vector<2x8x8xf32>
    %113 = math.exp %112 : vector<2x8x8xf32>
    %cst_28 = arith.constant dense<0.000000e+00> : vector<2x8xf32>
    %114 = vector.multi_reduction <add>, %113, %cst_28 [2] : vector<2x8x8xf32> to vector<2x8xf32>
    %115 = vector.shape_cast %114 : vector<2x8xf32> to vector<2x8x1xf32>
    %116 = tpu.reciprocal %115 {approx = true} : vector<2x8x1xf32> -> vector<2x8x1xf32>
    %117 = vector.broadcast %116 : vector<2x8x1xf32> to vector<2x8x8xf32>
    %118 = arith.mulf %113, %117 : vector<2x8x8xf32>
    %119 = arith.truncf %118 : vector<2x8x8xf32> to vector<2x8x8xbf16>
    "tpu.trace_start"() <{level = 10 : i32, message = "bqk,bkd->bqd"}> : () -> ()
    %cst_29 = arith.constant dense<0.000000e+00> : vector<2x8x8xf32>
    %120 = tpu.matmul %119, %103, %cst_29 {dimension_numbers = #tpu.dot_dimension_numbers<[2], [1], [1], [2], [0, 0, 0, 1, 1, 2], [0], [0]>} : vector<2x8x8xbf16>, vector<2x8x8xbf16>, vector<2x8x8xf32> -> vector<2x8x8xf32>
    "tpu.trace_stop"() : () -> ()
    %121 = vector.shape_cast %120 : vector<2x8x8xf32> to vector<16x8xf32>
    %122 = tpu.concatenate %40, %67, %94, %121 in 1 : vector<16x8xf32>, vector<16x8xf32>, vector<16x8xf32>, vector<16x8xf32> -> vector<16x32xf32>
    %123 = arith.truncf %122 : vector<16x32xf32> to vector<16x32xbf16>
    %c0_30 = arith.constant 0 : index
    %c0_31 = arith.constant 0 : index
    %c0_32 = arith.constant 0 : index
    %124 = vector.load %arg5[%c0_30, %c0_31, %c0_32] : memref<1x32x32xbf16, #tpu.memory_space<vmem>>, vector<1x32x32xbf16>
    %125 = vector.shape_cast %124 : vector<1x32x32xbf16> to vector<32x32xbf16>
    %cst_33 = arith.constant dense<0.000000e+00> : vector<16x32xf32>
    %126 = tpu.matmul %123, %125, %cst_33 {dimension_numbers = #tpu.dot_dimension_numbers<[1], [0], [0], [1], [0, 0, 1, 1], [], []>} : vector<16x32xbf16>, vector<32x32xbf16>, vector<16x32xf32> -> vector<16x32xf32>
    %c0_34 = arith.constant 0 : index
    %c0_35 = arith.constant 0 : index
    %c0_36 = arith.constant 0 : index
    %127 = vector.load %arg6[%c0_34, %c0_35, %c0_36] : memref<1x1x32xf32, #tpu.memory_space<vmem>>, vector<1x1x32xf32>
    %128 = vector.shape_cast %127 : vector<1x1x32xf32> to vector<1x32xf32>
    %129 = vector.broadcast %128 : vector<1x32xf32> to vector<16x32xf32>
    %130 = arith.addf %126, %129 : vector<16x32xf32>
    %131 = arith.addf %3, %130 : vector<16x32xf32>
    %c0_37 = arith.constant 0 : index
    %c0_38 = arith.constant 0 : index
    %c0_39 = arith.constant 0 : index
    %132 = vector.load %arg7[%c0_37, %c0_38, %c0_39] : memref<1x1x32xf32, #tpu.memory_space<vmem>>, vector<1x1x32xf32>
    %133 = vector.shape_cast %132 : vector<1x1x32xf32> to vector<1x32xf32>
    %c0_40 = arith.constant 0 : index
    %c0_41 = arith.constant 0 : index
    %c0_42 = arith.constant 0 : index
    %134 = vector.load %arg8[%c0_40, %c0_41, %c0_42] : memref<1x1x32xf32, #tpu.memory_space<vmem>>, vector<1x1x32xf32>
    %135 = vector.shape_cast %134 : vector<1x1x32xf32> to vector<1x32xf32>
    %cst_43 = arith.constant dense<0.000000e+00> : vector<16xf32>
    %136 = vector.multi_reduction <add>, %131, %cst_43 [1] : vector<16x32xf32> to vector<16xf32>
    %137 = vector.shape_cast %136 : vector<16xf32> to vector<16x1xf32>
    %cst_44 = arith.constant 3.200000e+01 : f32
    %138 = vector.broadcast %cst_44 : f32 to vector<16x1xf32>
    %139 = arith.divf %137, %138 : vector<16x1xf32>
    %140 = vector.broadcast %139 : vector<16x1xf32> to vector<16x32xf32>
    %141 = arith.subf %131, %140 : vector<16x32xf32>
    %142 = arith.mulf %141, %141 : vector<16x32xf32>
    %cst_45 = arith.constant dense<0.000000e+00> : vector<16xf32>
    %143 = vector.multi_reduction <add>, %142, %cst_45 [1] : vector<16x32xf32> to vector<16xf32>
    %144 = vector.shape_cast %143 : vector<16xf32> to vector<16x1xf32>
    %cst_46 = arith.constant 3.200000e+01 : f32
    %145 = vector.broadcast %cst_46 : f32 to vector<16x1xf32>
    %146 = arith.divf %144, %145 : vector<16x1xf32>
    %147 = vector.broadcast %139 : vector<16x1xf32> to vector<16x32xf32>
    %148 = arith.subf %131, %147 : vector<16x32xf32>
    %cst_47 = arith.constant 9.99999996E-13 : f32
    %149 = vector.broadcast %cst_47 : f32 to vector<16x1xf32>
    %150 = arith.addf %146, %149 : vector<16x1xf32>
    %151 = math.rsqrt %150 : vector<16x1xf32>
    %152 = vector.broadcast %151 : vector<16x1xf32> to vector<16x32xf32>
    %153 = arith.mulf %148, %152 : vector<16x32xf32>
    %154 = vector.broadcast %133 : vector<1x32xf32> to vector<16x32xf32>
    %155 = arith.mulf %153, %154 : vector<16x32xf32>
    %156 = vector.broadcast %135 : vector<1x32xf32> to vector<16x32xf32>
    %157 = arith.addf %155, %156 : vector<16x32xf32>
    %158 = arith.truncf %157 : vector<16x32xf32> to vector<16x32xbf16>
    %c0_48 = arith.constant 0 : index
    %c0_49 = arith.constant 0 : index
    %c0_50 = arith.constant 0 : index
    %159 = vector.load %arg9[%c0_48, %c0_49, %c0_50] : memref<1x32x64xbf16, #tpu.memory_space<vmem>>, vector<1x32x64xbf16>
    %160 = vector.shape_cast %159 : vector<1x32x64xbf16> to vector<32x64xbf16>
    %cst_51 = arith.constant dense<0.000000e+00> : vector<16x64xf32>
    %161 = tpu.matmul %158, %160, %cst_51 {dimension_numbers = #tpu.dot_dimension_numbers<[1], [0], [0], [1], [0, 0, 1, 1], [], []>} : vector<16x32xbf16>, vector<32x64xbf16>, vector<16x64xf32> -> vector<16x64xf32>
    %c0_52 = arith.constant 0 : index
    %c0_53 = arith.constant 0 : index
    %c0_54 = arith.constant 0 : index
    %162 = vector.load %arg10[%c0_52, %c0_53, %c0_54] : memref<1x1x64xf32, #tpu.memory_space<vmem>>, vector<1x1x64xf32>
    %163 = vector.shape_cast %162 : vector<1x1x64xf32> to vector<1x64xf32>
    %164 = vector.broadcast %163 : vector<1x64xf32> to vector<16x64xf32>
    %165 = arith.addf %161, %164 : vector<16x64xf32>
    %166 = arith.mulf %165, %165 : vector<16x64xf32>
    %167 = arith.mulf %165, %166 : vector<16x64xf32>
    %cst_55 = arith.constant 4.471500e-02 : f32
    %168 = vector.broadcast %cst_55 : f32 to vector<16x64xf32>
    %169 = arith.mulf %168, %167 : vector<16x64xf32>
    %170 = arith.addf %165, %169 : vector<16x64xf32>
    %cst_56 = arith.constant 0.797884583 : f32
    %171 = vector.broadcast %cst_56 : f32 to vector<16x64xf32>
    %172 = arith.mulf %171, %170 : vector<16x64xf32>
    %173 = math.tanh %172 : vector<16x64xf32>
    %cst_57 = arith.constant 1.000000e+00 : f32
    %174 = vector.broadcast %cst_57 : f32 to vector<16x64xf32>
    %175 = arith.addf %174, %173 : vector<16x64xf32>
    %cst_58 = arith.constant 5.000000e-01 : f32
    %176 = vector.broadcast %cst_58 : f32 to vector<16x64xf32>
    %177 = arith.mulf %176, %175 : vector<16x64xf32>
    %178 = arith.mulf %165, %177 : vector<16x64xf32>
    %179 = arith.truncf %178 : vector<16x64xf32> to vector<16x64xbf16>
    %c0_59 = arith.constant 0 : index
    %c0_60 = arith.constant 0 : index
    %c0_61 = arith.constant 0 : index
    %180 = vector.load %arg11[%c0_59, %c0_60, %c0_61] : memref<1x64x32xbf16, #tpu.memory_space<vmem>>, vector<1x64x32xbf16>
    %181 = vector.shape_cast %180 : vector<1x64x32xbf16> to vector<64x32xbf16>
    %cst_62 = arith.constant dense<0.000000e+00> : vector<16x32xf32>
    %182 = tpu.matmul %179, %181, %cst_62 {dimension_numbers = #tpu.dot_dimension_numbers<[1], [0], [0], [1], [0, 0, 1, 1], [], []>} : vector<16x64xbf16>, vector<64x32xbf16>, vector<16x32xf32> -> vector<16x32xf32>
    %c0_63 = arith.constant 0 : index
    %c0_64 = arith.constant 0 : index
    %c0_65 = arith.constant 0 : index
    %183 = vector.load %arg12[%c0_63, %c0_64, %c0_65] : memref<1x1x32xf32, #tpu.memory_space<vmem>>, vector<1x1x32xf32>
    %184 = vector.shape_cast %183 : vector<1x1x32xf32> to vector<1x32xf32>
    %185 = vector.broadcast %184 : vector<1x32xf32> to vector<16x32xf32>
    %186 = arith.addf %182, %185 : vector<16x32xf32>
    %187 = arith.addf %157, %186 : vector<16x32xf32>
    %c0_66 = arith.constant 0 : index
    %c0_67 = arith.constant 0 : index
    %c0_68 = arith.constant 0 : index
    %188 = vector.load %arg13[%c0_66, %c0_67, %c0_68] : memref<1x1x32xf32, #tpu.memory_space<vmem>>, vector<1x1x32xf32>
    %189 = vector.shape_cast %188 : vector<1x1x32xf32> to vector<1x32xf32>
    %c0_69 = arith.constant 0 : index
    %c0_70 = arith.constant 0 : index
    %c0_71 = arith.constant 0 : index
    %190 = vector.load %arg14[%c0_69, %c0_70, %c0_71] : memref<1x1x32xf32, #tpu.memory_space<vmem>>, vector<1x1x32xf32>
    %191 = vector.shape_cast %190 : vector<1x1x32xf32> to vector<1x32xf32>
    %cst_72 = arith.constant dense<0.000000e+00> : vector<16xf32>
    %192 = vector.multi_reduction <add>, %187, %cst_72 [1] : vector<16x32xf32> to vector<16xf32>
    %193 = vector.shape_cast %192 : vector<16xf32> to vector<16x1xf32>
    %cst_73 = arith.constant 3.200000e+01 : f32
    %194 = vector.broadcast %cst_73 : f32 to vector<16x1xf32>
    %195 = arith.divf %193, %194 : vector<16x1xf32>
    %196 = vector.broadcast %195 : vector<16x1xf32> to vector<16x32xf32>
    %197 = arith.subf %187, %196 : vector<16x32xf32>
    %198 = arith.mulf %197, %197 : vector<16x32xf32>
    %cst_74 = arith.constant dense<0.000000e+00> : vector<16xf32>
    %199 = vector.multi_reduction <add>, %198, %cst_74 [1] : vector<16x32xf32> to vector<16xf32>
    %200 = vector.shape_cast %199 : vector<16xf32> to vector<16x1xf32>
    %cst_75 = arith.constant 3.200000e+01 : f32
    %201 = vector.broadcast %cst_75 : f32 to vector<16x1xf32>
    %202 = arith.divf %200, %201 : vector<16x1xf32>
    %203 = vector.broadcast %195 : vector<16x1xf32> to vector<16x32xf32>
    %204 = arith.subf %187, %203 : vector<16x32xf32>
    %cst_76 = arith.constant 9.99999996E-13 : f32
    %205 = vector.broadcast %cst_76 : f32 to vector<16x1xf32>
    %206 = arith.addf %202, %205 : vector<16x1xf32>
    %207 = math.rsqrt %206 : vector<16x1xf32>
    %208 = vector.broadcast %207 : vector<16x1xf32> to vector<16x32xf32>
    %209 = arith.mulf %204, %208 : vector<16x32xf32>
    %210 = vector.broadcast %189 : vector<1x32xf32> to vector<16x32xf32>
    %211 = arith.mulf %209, %210 : vector<16x32xf32>
    %212 = vector.broadcast %191 : vector<1x32xf32> to vector<16x32xf32>
    %213 = arith.addf %211, %212 : vector<16x32xf32>
    %c0_77 = arith.constant 0 : index
    %c0_78 = arith.constant 0 : index
    %214 = vector.load %arg23[%c0_77, %c0_78] : memref<16x32xf32, #tpu.memory_space<vmem>>, vector<16x32xf32>
    tpu.vector_store %arg23[%c0_77, %c0_78], %213 {strides = array<i32>} : memref<16x32xf32, #tpu.memory_space<vmem>>, vector<16x32xf32>,
    %c1_i32 = arith.constant 1 : i32
    %215 = arith.cmpi eq, %arg0, %c1_i32 : i32
    %216 = arith.extui %215 : i1 to i32
    %c0_i32_79 = arith.constant 0 : i32
    %217 = arith.cmpi ne, %216, %c0_i32_79 : i32
    scf.if %217 {
      %c0_80 = arith.constant 0 : index
      %c0_81 = arith.constant 0 : index
      %218 = tpu.strided_load %arg23[%c0_80, %c0_81] {strides = array<i32: 8, 1>} : memref<16x32xf32, #tpu.memory_space<vmem>>, vector<2x32xf32>
      %c0_82 = arith.constant 0 : index
      %c0_83 = arith.constant 0 : index
      %219 = vector.load %arg15[%c0_82, %c0_83] : memref<32x32xf32, #tpu.memory_space<vmem>>, vector<32x32xf32>
      %cst_84 = arith.constant dense<0.000000e+00> : vector<2x32xf32>
      %220 = tpu.matmul %218, %219, %cst_84 {dimension_numbers = #tpu.dot_dimension_numbers<[1], [0], [0], [1], [0, 0, 1, 1], [], []>} : vector<2x32xf32>, vector<32x32xf32>, vector<2x32xf32> -> vector<2x32xf32>
      %c0_85 = arith.constant 0 : index
      %c0_86 = arith.constant 0 : index
      %221 = vector.load %arg16[%c0_85, %c0_86] : memref<1x32xf32, #tpu.memory_space<vmem>>, vector<1x32xf32>
      %222 = vector.broadcast %221 : vector<1x32xf32> to vector<2x32xf32>
      %223 = arith.addf %220, %222 : vector<2x32xf32>
      %224 = math.tanh %223 : vector<2x32xf32>
      %c0_87 = arith.constant 0 : index
      %c0_88 = arith.constant 0 : index
      %225 = vector.load %arg17[%c0_87, %c0_88] : memref<32x128xf32, #tpu.memory_space<vmem>>, vector<32x128xf32>
      %cst_89 = arith.constant dense<0.000000e+00> : vector<2x128xf32>
      %226 = tpu.matmul %224, %225, %cst_89 {dimension_numbers = #tpu.dot_dimension_numbers<[1], [0], [0], [1], [0, 0, 1, 1], [], []>} : vector<2x32xf32>, vector<32x128xf32>, vector<2x128xf32> -> vector<2x128xf32>
      %c0_90 = arith.constant 0 : index
      %c0_91 = arith.constant 0 : index
      %227 = vector.load %arg18[%c0_90, %c0_91] : memref<1x128xf32, #tpu.memory_space<vmem>>, vector<1x128xf32>
      %228 = vector.broadcast %227 : vector<1x128xf32> to vector<2x128xf32>
      %229 = arith.addf %226, %228 : vector<2x128xf32>
      %c0_92 = arith.constant 0 : index
      %c0_93 = arith.constant 0 : index
      %230 = vector.load %arg21[%c0_92, %c0_93] : memref<2x128xf32, #tpu.memory_space<vmem>>, vector<2x128xf32>
      tpu.vector_store %arg21[%c0_92, %c0_93], %229 {strides = array<i32>} : memref<2x128xf32, #tpu.memory_space<vmem>>, vector<2x128xf32>,
      %c0_94 = arith.constant 0 : index
      %c0_95 = arith.constant 0 : index
      %231 = vector.load %arg19[%c0_94, %c0_95] : memref<128x128xf32, #tpu.memory_space<vmem>>, vector<128x128xf32>
      %cst_96 = arith.constant dense<0.000000e+00> : vector<2x128xf32>
      %232 = tpu.matmul %229, %231, %cst_96 {dimension_numbers = #tpu.dot_dimension_numbers<[1], [0], [0], [1], [0, 0, 1, 1], [], []>} : vector<2x128xf32>, vector<128x128xf32>, vector<2x128xf32> -> vector<2x128xf32>
      %c0_97 = arith.constant 0 : index
      %c0_98 = arith.constant 0 : index
      %233 = vector.load %arg20[%c0_97, %c0_98] : memref<1x128xf32, #tpu.memory_space<vmem>>, vector<1x128xf32>
      %234 = vector.broadcast %233 : vector<1x128xf32> to vector<2x128xf32>
      %235 = arith.addf %232, %234 : vector<2x128xf32>
      %c0_99 = arith.constant 0 : index
      %c0_100 = arith.constant 0 : index
      %236 = vector.load %arg22[%c0_99, %c0_100] : memref<2x128xf32, #tpu.memory_space<vmem>>, vector<2x128xf32>
      tpu.vector_store %arg22[%c0_99, %c0_100], %235 {strides = array<i32>} : memref<2x128xf32, #tpu.memory_space<vmem>>, vector<2x128xf32>,
    } else {
    }
    return
  }
  func.func @transform_0(%arg0: i32) -> (i32, i32) {
    %c0_i32 = arith.constant 0 : i32
    %c0_i32_0 = arith.constant 0 : i32
    %c0_i32_1 = arith.constant 0 : i32
    return %c0_i32, %c0_i32_0 : i32, i32
  }
  func.func @transform_1(%arg0: i32) -> (i32, i32) {
    %c0_i32 = arith.constant 0 : i32
    %c0_i32_0 = arith.constant 0 : i32
    %c0_i32_1 = arith.constant 0 : i32
    return %c0_i32, %c0_i32_0 : i32, i32
  }
  func.func @transform_2(%arg0: i32) -> (i32, i32, i32) {
    %c0_i32 = arith.constant 0 : i32
    %c0_i32_0 = arith.constant 0 : i32
    %c0_i32_1 = arith.constant 0 : i32
    return %arg0, %c0_i32, %c0_i32_0 : i32, i32, i32
  }
  func.func @transform_3(%arg0: i32) -> (i32, i32, i32) {
    %c0_i32 = arith.constant 0 : i32
    %c0_i32_0 = arith.constant 0 : i32
    %c0_i32_1 = arith.constant 0 : i32
    return %arg0, %c0_i32, %c0_i32_0 : i32, i32, i32
  }
  func.func @transform_4(%arg0: i32) -> (i32, i32, i32) {
    %c0_i32 = arith.constant 0 : i32
    %c0_i32_0 = arith.constant 0 : i32
    %c0_i32_1 = arith.constant 0 : i32
    return %arg0, %c0_i32, %c0_i32_0 : i32, i32, i32
  }
  func.func @transform_5(%arg0: i32) -> (i32, i32, i32) {
    %c0_i32 = arith.constant 0 : i32
    %c0_i32_0 = arith.constant 0 : i32
    %c0_i32_1 = arith.constant 0 : i32
    return %arg0, %c0_i32, %c0_i32_0 : i32, i32, i32
  }
  func.func @transform_6(%arg0: i32) -> (i32, i32, i32) {
    %c0_i32 = arith.constant 0 : i32
    %c0_i32_0 = arith.constant 0 : i32
    %c0_i32_1 = arith.constant 0 : i32
    return %arg0, %c0_i32, %c0_i32_0 : i32, i32, i32
  }
  func.func @transform_7(%arg0: i32) -> (i32, i32, i32) {
    %c0_i32 = arith.constant 0 : i32
    %c0_i32_0 = arith.constant 0 : i32
    %c0_i32_1 = arith.constant 0 : i32
    return %arg0, %c0_i32, %c0_i32_0 : i32, i32, i32
  }
  func.func @transform_8(%arg0: i32) -> (i32, i32, i32) {
    %c0_i32 = arith.constant 0 : i32
    %c0_i32_0 = arith.constant 0 : i32
    %c0_i32_1 = arith.constant 0 : i32
    return %arg0, %c0_i32, %c0_i32_0 : i32, i32, i32
  }
  func.func @transform_9(%arg0: i32) -> (i32, i32, i32) {
    %c0_i32 = arith.constant 0 : i32
    %c0_i32_0 = arith.constant 0 : i32
    %c0_i32_1 = arith.constant 0 : i32
    return %arg0, %c0_i32, %c0_i32_0 : i32, i32, i32
  }
  func.func @transform_10(%arg0: i32) -> (i32, i32, i32) {
    %c0_i32 = arith.constant 0 : i32
    %c0_i32_0 = arith.constant 0 : i32
    %c0_i32_1 = arith.constant 0 : i32
    return %arg0, %c0_i32, %c0_i32_0 : i32, i32, i32
  }
  func.func @transform_11(%arg0: i32) -> (i32, i32, i32) {
    %c0_i32 = arith.constant 0 : i32
    %c0_i32_0 = arith.constant 0 : i32
    %c0_i32_1 = arith.constant 0 : i32
    return %arg0, %c0_i32, %c0_i32_0 : i32, i32, i32
  }
  func.func @transform_12(%arg0: i32) -> (i32, i32, i32) {
    %c0_i32 = arith.constant 0 : i32
    %c0_i32_0 = arith.constant 0 : i32
    %c0_i32_1 = arith.constant 0 : i32
    return %arg0, %c0_i32, %c0_i32_0 : i32, i32, i32
  }
  func.func @transform_13(%arg0: i32) -> (i32, i32, i32) {
    %c0_i32 = arith.constant 0 : i32
    %c0_i32_0 = arith.constant 0 : i32
    %c0_i32_1 = arith.constant 0 : i32
    return %arg0, %c0_i32, %c0_i32_0 : i32, i32, i32
  }
  func.func @transform_14(%arg0: i32) -> (i32, i32) {
    %c0_i32 = arith.constant 0 : i32
    %c0_i32_0 = arith.constant 0 : i32
    %c0_i32_1 = arith.constant 0 : i32
    return %c0_i32, %c0_i32_0 : i32, i32
  }
  func.func @transform_15(%arg0: i32) -> (i32, i32) {
    %c0_i32 = arith.constant 0 : i32
    %c0_i32_0 = arith.constant 0 : i32
    %c0_i32_1 = arith.constant 0 : i32
    return %c0_i32, %c0_i32_0 : i32, i32
  }
  func.func @transform_16(%arg0: i32) -> (i32, i32) {
    %c0_i32 = arith.constant 0 : i32
    %c0_i32_0 = arith.constant 0 : i32
    %c0_i32_1 = arith.constant 0 : i32
    return %c0_i32, %c0_i32_0 : i32, i32
  }
  func.func @transform_17(%arg0: i32) -> (i32, i32) {
    %c0_i32 = arith.constant 0 : i32
    %c0_i32_0 = arith.constant 0 : i32
    %c0_i32_1 = arith.constant 0 : i32
    return %c0_i32, %c0_i32_0 : i32, i32
  }
  func.func @transform_18(%arg0: i32) -> (i32, i32) {
    %c0_i32 = arith.constant 0 : i32
    %c0_i32_0 = arith.constant 0 : i32
    %c0_i32_1 = arith.constant 0 : i32
    return %c0_i32, %c0_i32_0 : i32, i32
  }
  func.func @transform_19(%arg0: i32) -> (i32, i32) {
    %c0_i32 = arith.constant 0 : i32
    %c0_i32_0 = arith.constant 0 : i32
    %c0_i32_1 = arith.constant 0 : i32
    return %c0_i32, %c0_i32_0 : i32, i32
  }
  func.func @transform_20(%arg0: i32) -> (i32, i32) {
    %c0_i32 = arith.constant 0 : i32
    %c0_i32_0 = arith.constant 0 : i32
    %c0_i32_1 = arith.constant 0 : i32
    return %c0_i32, %c0_i32_0 : i32, i32
  }
  func.func @transform_21(%arg0: i32) -> (i32, i32) {
    %c0_i32 = arith.constant 0 : i32
    %c0_i32_0 = arith.constant 0 : i32
    %c0_i32_1 = arith.constant 0 : i32
    return %c0_i32, %c0_i32_0 : i32, i32
  }
}

</mosaic_0001>

<llo_original>
// kernel: _lambda_.1
$region0: #{_lambda_.1}
  #allocation0 [shape = 'u32[]', space=smem, size = 0x4, offset = 0x4, fixed_abs, tag = 'smem constant byte address 0x4 - core index']
  #allocation1 [shape = 'u32[72,128]{1,0:T(1,128)}', space=vmem, size = 0x9000, scoped, tag = 'internal scratch']
  #allocation2 [shape = 'f32[16,32]{1,0:T(8,128)}', space=vmem, size = 0x2000, scoped, tag = 'scratch operand']
  %s0 = inlined_call_operand.vmem [shape: f32[16,32], index: 0, kind: input, shape index: {}]
  %s1 = inlined_call_operand.vmem [shape: f32[2,8], index: 1, kind: input, shape index: {}]
  %s2 = inlined_call_operand.vmem [shape: bf16[2,32,96], index: 2, kind: input, shape index: {}]
  %s3 = inlined_call_operand.vmem [shape: f32[2,1,96], index: 3, kind: input, shape index: {}]
  %s4 = inlined_call_operand.vmem [shape: bf16[2,32,32], index: 4, kind: input, shape index: {}]
  %s5 = inlined_call_operand.vmem [shape: f32[2,1,32], index: 5, kind: input, shape index: {}]
  %s6 = inlined_call_operand.vmem [shape: f32[2,1,32], index: 6, kind: input, shape index: {}, may-alias: {6,12}]
  %s7 = inlined_call_operand.vmem [shape: f32[2,1,32], index: 7, kind: input, shape index: {}, may-alias: {7,13}]
  %s8 = inlined_call_operand.vmem [shape: bf16[2,32,64], index: 8, kind: input, shape index: {}]
  %s9 = inlined_call_operand.vmem [shape: f32[2,1,64], index: 9, kind: input, shape index: {}]
  %s10 = inlined_call_operand.vmem [shape: bf16[2,64,32], index: 10, kind: input, shape index: {}]
  %s11 = inlined_call_operand.vmem [shape: f32[2,1,32], index: 11, kind: input, shape index: {}]
  %s12 = inlined_call_operand.vmem [shape: f32[2,1,32], index: 12, kind: input, shape index: {}, may-alias: {6,12}]
  %s13 = inlined_call_operand.vmem [shape: f32[2,1,32], index: 13, kind: input, shape index: {}, may-alias: {7,13}]
  %s14 = inlined_call_operand.vmem [shape: f32[32,32], index: 14, kind: input, shape index: {}]
  %s15 = inlined_call_operand.vmem [shape: f32[1,32], index: 15, kind: input, shape index: {}]
  %s16 = inlined_call_operand.vmem [shape: f32[32,128], index: 16, kind: input, shape index: {}]
  %s17 = inlined_call_operand.vmem [shape: f32[1,128], index: 17, kind: input, shape index: {}]
  %s18 = inlined_call_operand.vmem [shape: f32[128,128], index: 18, kind: input, shape index: {}]
  %s19 = inlined_call_operand.vmem [shape: f32[1,128], index: 19, kind: input, shape index: {}]
  %s20 = inlined_call_operand.vmem [shape: f32[2,128], index: 20, kind: output, shape index: {0}]
  %s21 = inlined_call_operand.vmem [shape: f32[2,128], index: 21, kind: output, shape index: {1}]
  %22 = xla_tuple %s20, %s21
  %s23 = sld [smem:[#allocation0]]
  $region129: #{_lambda_.1} parent=0
    _
  %s25 = ssub.s32 1, %s23
  %s26 = scalar_select 0, %s25, %s23
  loop: start=0, step=1, limit=4
  $region2: #{_lambda_.1} parent=0 // loop_pre_header
    _
  $region3: #{_lambda_.1} parent=0 // loop_header
    %s28 = sphi 0, %s32
    %p29 = scmp.ge.s32.totalorder %s28, 4
    %s36 = sphi 0, %s36
    %s38 = sphi 0, %s36
    %s39 = sphi 0, %s38
    %s53 = sphi 0, %s39
    %s57 = sphi 0, %s57
    %s59 = sphi 0, %s57
    %s60 = sphi 0, %s59
    %s74 = sphi 0, %s60
    %s80 = sphi 0, %s82
    %s83 = sphi 0, %s80
    %s84 = sphi 0, %s83
    %s100 = sphi 0, %s84
    %s106 = sphi 0, %s108
    %s109 = sphi 0, %s106
    %s110 = sphi 0, %s109
    %s126 = sphi 0, %s110
    %s132 = sphi 0, %s134
    %s135 = sphi 0, %s132
    %s136 = sphi 0, %s135
    %s152 = sphi 0, %s136
    %s158 = sphi 0, %s160
    %s161 = sphi 0, %s158
    %s162 = sphi 0, %s161
    %s178 = sphi 0, %s162
    %s184 = sphi 0, %s186
    %s187 = sphi 0, %s184
    %s188 = sphi 0, %s187
    %s204 = sphi 0, %s188
    %s210 = sphi 0, %s212
    %s213 = sphi 0, %s210
    %s214 = sphi 0, %s213
    %s230 = sphi 0, %s214
    %s236 = sphi 0, %s238
    %s239 = sphi 0, %s236
    %s240 = sphi 0, %s239
    %s256 = sphi 0, %s240
    %s262 = sphi 0, %s264
    %s265 = sphi 0, %s262
    %s266 = sphi 0, %s265
    %s282 = sphi 0, %s266
    %s288 = sphi 0, %s290
    %s291 = sphi 0, %s288
    %s292 = sphi 0, %s291
    %s308 = sphi 0, %s292
    %s314 = sphi 0, %s316
    %s317 = sphi 0, %s314
    %s318 = sphi 0, %s317
    %s334 = sphi 0, %s318
    %s340 = sphi 0, %s342
    %s343 = sphi 0, %s340
    %s344 = sphi 0, %s343
    %s360 = sphi 0, %s344
    %s366 = sphi 0, %s368
    %s369 = sphi 0, %s366
    %s370 = sphi 0, %s369
    %s386 = sphi 0, %s370
    %s390 = sphi 0, %s390
    %s392 = sphi 0, %s390
    %s393 = sphi 0, %s392
    %s407 = sphi 0, %s393
    %s411 = sphi 0, %s411
    %s413 = sphi 0, %s411
    %s414 = sphi 0, %s413
    %s428 = sphi 0, %s414
    %s432 = sphi 0, %s432
    %s434 = sphi 0, %s432
    %s435 = sphi 0, %s434
    %s449 = sphi 0, %s435
    %s453 = sphi 0, %s453
    %s455 = sphi 0, %s453
    %s456 = sphi 0, %s455
    %s470 = sphi 0, %s456
    %s474 = sphi 0, %s474
    %s476 = sphi 0, %s474
    %s477 = sphi 0, %s476
    %s491 = sphi 0, %s477
    %s495 = sphi 0, %s495
    %s497 = sphi 0, %s495
    %s498 = sphi 0, %s497
    %s512 = sphi 0, %s498
    %s516 = sphi 0, %s516
    %s518 = sphi 0, %s516
    %s519 = sphi 0, %s518
    %s533 = sphi 0, %s519
    %s537 = sphi 0, %s537
    %s539 = sphi 0, %s537
    %s540 = sphi 0, %s539
    %s554 = sphi 0, %s540
  $region4: #{_lambda_.1} parent=0 // loop_header_branch
    %31 = sbr.rel (%p29) target = $region8
  $region5: #{_lambda_.1} parent=0 // loop_body
    %s33 = ssub.s32 %s28, 1
    %s34 = ssub.s32 %s28, 2
    %s35 = sadd.s32 %s28, 1
    %s37 = sadd.s32 %s36, 1
    %p40 = scmp.eq.s32.totalorder %s28, 1
    %p41 = scmp.ne.s32.totalorder %s36, %s38
    %p42 = scmp.eq.s32.totalorder %s28, 0
    %p43 = por %p41, %p42
    %p44 = scmp.ne.s32.totalorder %s36, %s38
    %p45 = scmp.eq.s32.totalorder %s33, 1
    %p46 = por %p44, %p45
    %p47 = scmp.ne.s32.totalorder %s38, %s39
    %p48 = scmp.eq.s32.totalorder %s33, 0
    %p49 = por %p47, %p48
    %p50 = scmp.ne.s32.totalorder %s38, %s39
    %p51 = scmp.eq.s32.totalorder %s34, 1
    %p52 = por %p50, %p51
    %p54 = scmp.ne.s32.totalorder %s39, %s53
    %p55 = scmp.eq.s32.totalorder %s34, 0
    %p56 = por %p54, %p55
    %s58 = sadd.s32 %s57, 1
    %p61 = scmp.eq.s32.totalorder %s28, 1
    %p62 = scmp.ne.s32.totalorder %s57, %s59
    %p63 = scmp.eq.s32.totalorder %s28, 0
    %p64 = por %p62, %p63
    %p65 = scmp.ne.s32.totalorder %s57, %s59
    %p66 = scmp.eq.s32.totalorder %s33, 1
    %p67 = por %p65, %p66
    %p68 = scmp.ne.s32.totalorder %s59, %s60
    %p69 = scmp.eq.s32.totalorder %s33, 0
    %p70 = por %p68, %p69
    %p71 = scmp.ne.s32.totalorder %s59, %s60
    %p72 = scmp.eq.s32.totalorder %s34, 1
    %p73 = por %p71, %p72
    %p75 = scmp.ne.s32.totalorder %s60, %s74
    %p76 = scmp.eq.s32.totalorder %s34, 0
    %p77 = por %p75, %p76
    %s78 = ssub.s32 %s28, %s35
    %p79 = scmp.eq.s32.totalorder %s78, 0
    %s81 = sadd.s32 %s80, 1
    %s82 = scalar_select %p79, %s80, %s81
    %p85 = pneg %p79
    %p86 = scmp.eq.s32.totalorder %s28, 1
    %p87 = por %p85, %p86
    %p88 = scmp.ne.s32.totalorder %s80, %s83
    %p89 = scmp.eq.s32.totalorder %s28, 0
    %p90 = por %p88, %p89
    %p91 = scmp.ne.s32.totalorder %s80, %s83
    %p92 = scmp.eq.s32.totalorder %s33, 1
    %p93 = por %p91, %p92
    %p94 = scmp.ne.s32.totalorder %s83, %s84
    %p95 = scmp.eq.s32.totalorder %s33, 0
    %p96 = por %p94, %p95
    %p97 = scmp.ne.s32.totalorder %s83, %s84
    %p98 = scmp.eq.s32.totalorder %s34, 1
    %p99 = por %p97, %p98
    %p101 = scmp.ne.s32.totalorder %s84, %s100
    %p102 = scmp.eq.s32.totalorder %s34, 0
    %p103 = por %p101, %p102
    %s104 = ssub.s32 %s28, %s35
    %p105 = scmp.eq.s32.totalorder %s104, 0
    %s107 = sadd.s32 %s106, 1
    %s108 = scalar_select %p105, %s106, %s107
    %p111 = pneg %p105
    %p112 = scmp.eq.s32.totalorder %s28, 1
    %p113 = por %p111, %p112
    %p114 = scmp.ne.s32.totalorder %s106, %s109
    %p115 = scmp.eq.s32.totalorder %s28, 0
    %p116 = por %p114, %p115
    %p117 = scmp.ne.s32.totalorder %s106, %s109
    %p118 = scmp.eq.s32.totalorder %s33, 1
    %p119 = por %p117, %p118
    %p120 = scmp.ne.s32.totalorder %s109, %s110
    %p121 = scmp.eq.s32.totalorder %s33, 0
    %p122 = por %p120, %p121
    %p123 = scmp.ne.s32.totalorder %s109, %s110
    %p124 = scmp.eq.s32.totalorder %s34, 1
    %p125 = por %p123, %p124
    %p127 = scmp.ne.s32.totalorder %s110, %s126
    %p128 = scmp.eq.s32.totalorder %s34, 0
    %p129 = por %p127, %p128
    %s130 = ssub.s32 %s28, %s35
    %p131 = scmp.eq.s32.totalorder %s130, 0
    %s133 = sadd.s32 %s132, 1
    %s134 = scalar_select %p131, %s132, %s133
    %p137 = pneg %p131
    %p138 = scmp.eq.s32.totalorder %s28, 1
    %p139 = por %p137, %p138
    %p140 = scmp.ne.s32.totalorder %s132, %s135
    %p141 = scmp.eq.s32.totalorder %s28, 0
    %p142 = por %p140, %p141
    %p143 = scmp.ne.s32.totalorder %s132, %s135
    %p144 = scmp.eq.s32.totalorder %s33, 1
    %p145 = por %p143, %p144
    %p146 = scmp.ne.s32.totalorder %s135, %s136
    %p147 = scmp.eq.s32.totalorder %s33, 0
    %p148 = por %p146, %p147
    %p149 = scmp.ne.s32.totalorder %s135, %s136
    %p150 = scmp.eq.s32.totalorder %s34, 1
    %p151 = por %p149, %p150
    %p153 = scmp.ne.s32.totalorder %s136, %s152
    %p154 = scmp.eq.s32.totalorder %s34, 0
    %p155 = por %p153, %p154
    %s156 = ssub.s32 %s28, %s35
    %p157 = scmp.eq.s32.totalorder %s156, 0
    %s159 = sadd.s32 %s158, 1
    %s160 = scalar_select %p157, %s158, %s159
    %p163 = pneg %p157
    %p164 = scmp.eq.s32.totalorder %s28, 1
    %p165 = por %p163, %p164
    %p166 = scmp.ne.s32.totalorder %s158, %s161
    %p167 = scmp.eq.s32.totalorder %s28, 0
    %p168 = por %p166, %p167
    %p169 = scmp.ne.s32.totalorder %s158, %s161
    %p170 = scmp.eq.s32.totalorder %s33, 1
    %p171 = por %p169, %p170
    %p172 = scmp.ne.s32.totalorder %s161, %s162
    %p173 = scmp.eq.s32.totalorder %s33, 0
    %p174 = por %p172, %p173
    %p175 = scmp.ne.s32.totalorder %s161, %s162
    %p176 = scmp.eq.s32.totalorder %s34, 1
    %p177 = por %p175, %p176
    %p179 = scmp.ne.s32.totalorder %s162, %s178
    %p180 = scmp.eq.s32.totalorder %s34, 0
    %p181 = por %p179, %p180
    %s182 = ssub.s32 %s28, %s35
    %p183 = scmp.eq.s32.totalorder %s182, 0
    %s185 = sadd.s32 %s184, 1
    %s186 = scalar_select %p183, %s184, %s185
    %p189 = pneg %p183
    %p190 = scmp.eq.s32.totalorder %s28, 1
    %p191 = por %p189, %p190
    %p192 = scmp.ne.s32.totalorder %s184, %s187
    %p193 = scmp.eq.s32.totalorder %s28, 0
    %p194 = por %p192, %p193
    %p195 = scmp.ne.s32.totalorder %s184, %s187
    %p196 = scmp.eq.s32.totalorder %s33, 1
    %p197 = por %p195, %p196
    %p198 = scmp.ne.s32.totalorder %s187, %s188
    %p199 = scmp.eq.s32.totalorder %s33, 0
    %p200 = por %p198, %p199
    %p201 = scmp.ne.s32.totalorder %s187, %s188
    %p202 = scmp.eq.s32.totalorder %s34, 1
    %p203 = por %p201, %p202
    %p205 = scmp.ne.s32.totalorder %s188, %s204
    %p206 = scmp.eq.s32.totalorder %s34, 0
    %p207 = por %p205, %p206
    %s208 = ssub.s32 %s28, %s35
    %p209 = scmp.eq.s32.totalorder %s208, 0
    %s211 = sadd.s32 %s210, 1
    %s212 = scalar_select %p209, %s210, %s211
    %p215 = pneg %p209
    %p216 = scmp.eq.s32.totalorder %s28, 1
    %p217 = por %p215, %p216
    %p218 = scmp.ne.s32.totalorder %s210, %s213
    %p219 = scmp.eq.s32.totalorder %s28, 0
    %p220 = por %p218, %p219
    %p221 = scmp.ne.s32.totalorder %s210, %s213
    %p222 = scmp.eq.s32.totalorder %s33, 1
    %p223 = por %p221, %p222
    %p224 = scmp.ne.s32.totalorder %s213, %s214
    %p225 = scmp.eq.s32.totalorder %s33, 0
    %p226 = por %p224, %p225
    %p227 = scmp.ne.s32.totalorder %s213, %s214
    %p228 = scmp.eq.s32.totalorder %s34, 1
    %p229 = por %p227, %p228
    %p231 = scmp.ne.s32.totalorder %s214, %s230
    %p232 = scmp.eq.s32.totalorder %s34, 0
    %p233 = por %p231, %p232
    %s234 = ssub.s32 %s28, %s35
    %p235 = scmp.eq.s32.totalorder %s234, 0
    %s237 = sadd.s32 %s236, 1
    %s238 = scalar_select %p235, %s236, %s237
    %p241 = pneg %p235
    %p242 = scmp.eq.s32.totalorder %s28, 1
    %p243 = por %p241, %p242
    %p244 = scmp.ne.s32.totalorder %s236, %s239
    %p245 = scmp.eq.s32.totalorder %s28, 0
    %p246 = por %p244, %p245
    %p247 = scmp.ne.s32.totalorder %s236, %s239
    %p248 = scmp.eq.s32.totalorder %s33, 1
    %p249 = por %p247, %p248
    %p250 = scmp.ne.s32.totalorder %s239, %s240
    %p251 = scmp.eq.s32.totalorder %s33, 0
    %p252 = por %p250, %p251
    %p253 = scmp.ne.s32.totalorder %s239, %s240
    %p254 = scmp.eq.s32.totalorder %s34, 1
    %p255 = por %p253, %p254
    %p257 = scmp.ne.s32.totalorder %s240, %s256
    %p258 = scmp.eq.s32.totalorder %s34, 0
    %p259 = por %p257, %p258
    %s260 = ssub.s32 %s28, %s35
    %p261 = scmp.eq.s32.totalorder %s260, 0
    %s263 = sadd.s32 %s262, 1
    %s264 = scalar_select %p261, %s262, %s263
    %p267 = pneg %p261
    %p268 = scmp.eq.s32.totalorder %s28, 1
    %p269 = por %p267, %p268
    %p270 = scmp.ne.s32.totalorder %s262, %s265
    %p271 = scmp.eq.s32.totalorder %s28, 0
    %p272 = por %p270, %p271
    %p273 = scmp.ne.s32.totalorder %s262, %s265
    %p274 = scmp.eq.s32.totalorder %s33, 1
    %p275 = por %p273, %p274
    %p276 = scmp.ne.s32.totalorder %s265, %s266
    %p277 = scmp.eq.s32.totalorder %s33, 0
    %p278 = por %p276, %p277
    %p279 = scmp.ne.s32.totalorder %s265, %s266
    %p280 = scmp.eq.s32.totalorder %s34, 1
    %p281 = por %p279, %p280
    %p283 = scmp.ne.s32.totalorder %s266, %s282
    %p284 = scmp.eq.s32.totalorder %s34, 0
    %p285 = por %p283, %p284
    %s286 = ssub.s32 %s28, %s35
    %p287 = scmp.eq.s32.totalorder %s286, 0
    %s289 = sadd.s32 %s288, 1
    %s290 = scalar_select %p287, %s288, %s289
    %p293 = pneg %p287
    %p294 = scmp.eq.s32.totalorder %s28, 1
    %p295 = por %p293, %p294
    %p296 = scmp.ne.s32.totalorder %s288, %s291
    %p297 = scmp.eq.s32.totalorder %s28, 0
    %p298 = por %p296, %p297
    %p299 = scmp.ne.s32.totalorder %s288, %s291
    %p300 = scmp.eq.s32.totalorder %s33, 1
    %p301 = por %p299, %p300
    %p302 = scmp.ne.s32.totalorder %s291, %s292
    %p303 = scmp.eq.s32.totalorder %s33, 0
    %p304 = por %p302, %p303
    %p305 = scmp.ne.s32.totalorder %s291, %s292
    %p306 = scmp.eq.s32.totalorder %s34, 1
    %p307 = por %p305, %p306
    %p309 = scmp.ne.s32.totalorder %s292, %s308
    %p310 = scmp.eq.s32.totalorder %s34, 0
    %p311 = por %p309, %p310
    %s312 = ssub.s32 %s28, %s35
    %p313 = scmp.eq.s32.totalorder %s312, 0
    %s315 = sadd.s32 %s314, 1
    %s316 = scalar_select %p313, %s314, %s315
    %p319 = pneg %p313
    %p320 = scmp.eq.s32.totalorder %s28, 1
    %p321 = por %p319, %p320
    %p322 = scmp.ne.s32.totalorder %s314, %s317
    %p323 = scmp.eq.s32.totalorder %s28, 0
    %p324 = por %p322, %p323
    %p325 = scmp.ne.s32.totalorder %s314, %s317
    %p326 = scmp.eq.s32.totalorder %s33, 1
    %p327 = por %p325, %p326
    %p328 = scmp.ne.s32.totalorder %s317, %s318
    %p329 = scmp.eq.s32.totalorder %s33, 0
    %p330 = por %p328, %p329
    %p331 = scmp.ne.s32.totalorder %s317, %s318
    %p332 = scmp.eq.s32.totalorder %s34, 1
    %p333 = por %p331, %p332
    %p335 = scmp.ne.s32.totalorder %s318, %s334
    %p336 = scmp.eq.s32.totalorder %s34, 0
    %p337 = por %p335, %p336
    %s338 = ssub.s32 %s28, %s35
    %p339 = scmp.eq.s32.totalorder %s338, 0
    %s341 = sadd.s32 %s340, 1
    %s342 = scalar_select %p339, %s340, %s341
    %p345 = pneg %p339
    %p346 = scmp.eq.s32.totalorder %s28, 1
    %p347 = por %p345, %p346
    %p348 = scmp.ne.s32.totalorder %s340, %s343
    %p349 = scmp.eq.s32.totalorder %s28, 0
    %p350 = por %p348, %p349
    %p351 = scmp.ne.s32.totalorder %s340, %s343
    %p352 = scmp.eq.s32.totalorder %s33, 1
    %p353 = por %p351, %p352
    %p354 = scmp.ne.s32.totalorder %s343, %s344
    %p355 = scmp.eq.s32.totalorder %s33, 0
    %p356 = por %p354, %p355
    %p357 = scmp.ne.s32.totalorder %s343, %s344
    %p358 = scmp.eq.s32.totalorder %s34, 1
    %p359 = por %p357, %p358
    %p361 = scmp.ne.s32.totalorder %s344, %s360
    %p362 = scmp.eq.s32.totalorder %s34, 0
    %p363 = por %p361, %p362
    %s364 = ssub.s32 %s28, %s35
    %p365 = scmp.eq.s32.totalorder %s364, 0
    %s367 = sadd.s32 %s366, 1
    %s368 = scalar_select %p365, %s366, %s367
    %p371 = pneg %p365
    %p372 = scmp.eq.s32.totalorder %s28, 1
    %p373 = por %p371, %p372
    %p374 = scmp.ne.s32.totalorder %s366, %s369
    %p375 = scmp.eq.s32.totalorder %s28, 0
    %p376 = por %p374, %p375
    %p377 = scmp.ne.s32.totalorder %s366, %s369
    %p378 = scmp.eq.s32.totalorder %s33, 1
    %p379 = por %p377, %p378
    %p380 = scmp.ne.s32.totalorder %s369, %s370
    %p381 = scmp.eq.s32.totalorder %s33, 0
    %p382 = por %p380, %p381
    %p383 = scmp.ne.s32.totalorder %s369, %s370
    %p384 = scmp.eq.s32.totalorder %s34, 1
    %p385 = por %p383, %p384
    %p387 = scmp.ne.s32.totalorder %s370, %s386
    %p388 = scmp.eq.s32.totalorder %s34, 0
    %p389 = por %p387, %p388
    %s391 = sadd.s32 %s390, 1
    %p394 = scmp.eq.s32.totalorder %s28, 1
    %p395 = scmp.ne.s32.totalorder %s390, %s392
    %p396 = scmp.eq.s32.totalorder %s28, 0
    %p397 = por %p395, %p396
    %p398 = scmp.ne.s32.totalorder %s390, %s392
    %p399 = scmp.eq.s32.totalorder %s33, 1
    %p400 = por %p398, %p399
    %p401 = scmp.ne.s32.totalorder %s392, %s393
    %p402 = scmp.eq.s32.totalorder %s33, 0
    %p403 = por %p401, %p402
    %p404 = scmp.ne.s32.totalorder %s392, %s393
    %p405 = scmp.eq.s32.totalorder %s34, 1
    %p406 = por %p404, %p405
    %p408 = scmp.ne.s32.totalorder %s393, %s407
    %p409 = scmp.eq.s32.totalorder %s34, 0
    %p410 = por %p408, %p409
    %s412 = sadd.s32 %s411, 1
    %p415 = scmp.eq.s32.totalorder %s28, 1
    %p416 = scmp.ne.s32.totalorder %s411, %s413
    %p417 = scmp.eq.s32.totalorder %s28, 0
    %p418 = por %p416, %p417
    %p419 = scmp.ne.s32.totalorder %s411, %s413
    %p420 = scmp.eq.s32.totalorder %s33, 1
    %p421 = por %p419, %p420
    %p422 = scmp.ne.s32.totalorder %s413, %s414
    %p423 = scmp.eq.s32.totalorder %s33, 0
    %p424 = por %p422, %p423
    %p425 = scmp.ne.s32.totalorder %s413, %s414
    %p426 = scmp.eq.s32.totalorder %s34, 1
    %p427 = por %p425, %p426
    %p429 = scmp.ne.s32.totalorder %s414, %s428
    %p430 = scmp.eq.s32.totalorder %s34, 0
    %p431 = por %p429, %p430
    %s433 = sadd.s32 %s432, 1
    %p436 = scmp.eq.s32.totalorder %s28, 1
    %p437 = scmp.ne.s32.totalorder %s432, %s434
    %p438 = scmp.eq.s32.totalorder %s28, 0
    %p439 = por %p437, %p438
    %p440 = scmp.ne.s32.totalorder %s432, %s434
    %p441 = scmp.eq.s32.totalorder %s33, 1
    %p442 = por %p440, %p441
    %p443 = scmp.ne.s32.totalorder %s434, %s435
    %p444 = scmp.eq.s32.totalorder %s33, 0
    %p445 = por %p443, %p444
    %p446 = scmp.ne.s32.totalorder %s434, %s435
    %p447 = scmp.eq.s32.totalorder %s34, 1
    %p448 = por %p446, %p447
    %p450 = scmp.ne.s32.totalorder %s435, %s449
    %p451 = scmp.eq.s32.totalorder %s34, 0
    %p452 = por %p450, %p451
    %s454 = sadd.s32 %s453, 1
    %p457 = scmp.eq.s32.totalorder %s28, 1
    %p458 = scmp.ne.s32.totalorder %s453, %s455
    %p459 = scmp.eq.s32.totalorder %s28, 0
    %p460 = por %p458, %p459
    %p461 = scmp.ne.s32.totalorder %s453, %s455
    %p462 = scmp.eq.s32.totalorder %s33, 1
    %p463 = por %p461, %p462
    %p464 = scmp.ne.s32.totalorder %s455, %s456
    %p465 = scmp.eq.s32.totalorder %s33, 0
    %p466 = por %p464, %p465
    %p467 = scmp.ne.s32.totalorder %s455, %s456
    %p468 = scmp.eq.s32.totalorder %s34, 1
    %p469 = por %p467, %p468
    %p471 = scmp.ne.s32.totalorder %s456, %s470
    %p472 = scmp.eq.s32.totalorder %s34, 0
    %p473 = por %p471, %p472
    %s475 = sadd.s32 %s474, 1
    %p478 = scmp.eq.s32.totalorder %s28, 1
    %p479 = scmp.ne.s32.totalorder %s474, %s476
    %p480 = scmp.eq.s32.totalorder %s28, 0
    %p481 = por %p479, %p480
    %p482 = scmp.ne.s32.totalorder %s474, %s476
    %p483 = scmp.eq.s32.totalorder %s33, 1
    %p484 = por %p482, %p483
    %p485 = scmp.ne.s32.totalorder %s476, %s477
    %p486 = scmp.eq.s32.totalorder %s33, 0
    %p487 = por %p485, %p486
    %p488 = scmp.ne.s32.totalorder %s476, %s477
    %p489 = scmp.eq.s32.totalorder %s34, 1
    %p490 = por %p488, %p489
    %p492 = scmp.ne.s32.totalorder %s477, %s491
    %p493 = scmp.eq.s32.totalorder %s34, 0
    %p494 = por %p492, %p493
    %s496 = sadd.s32 %s495, 1
    %p499 = scmp.eq.s32.totalorder %s28, 1
    %p500 = scmp.ne.s32.totalorder %s495, %s497
    %p501 = scmp.eq.s32.totalorder %s28, 0
    %p502 = por %p500, %p501
    %p503 = scmp.ne.s32.totalorder %s495, %s497
    %p504 = scmp.eq.s32.totalorder %s33, 1
    %p505 = por %p503, %p504
    %p506 = scmp.ne.s32.totalorder %s497, %s498
    %p507 = scmp.eq.s32.totalorder %s33, 0
    %p508 = por %p506, %p507
    %p509 = scmp.ne.s32.totalorder %s497, %s498
    %p510 = scmp.eq.s32.totalorder %s34, 1
    %p511 = por %p509, %p510
    %p513 = scmp.ne.s32.totalorder %s498, %s512
    %p514 = scmp.eq.s32.totalorder %s34, 0
    %p515 = por %p513, %p514
    %s517 = sadd.s32 %s516, 1
    %p520 = scmp.eq.s32.totalorder %s28, 1
    %p521 = scmp.ne.s32.totalorder %s516, %s518
    %p522 = scmp.eq.s32.totalorder %s28, 0
    %p523 = por %p521, %p522
    %p524 = scmp.ne.s32.totalorder %s516, %s518
    %p525 = scmp.eq.s32.totalorder %s33, 1
    %p526 = por %p524, %p525
    %p527 = scmp.ne.s32.totalorder %s518, %s519
    %p528 = scmp.eq.s32.totalorder %s33, 0
    %p529 = por %p527, %p528
    %p530 = scmp.ne.s32.totalorder %s518, %s519
    %p531 = scmp.eq.s32.totalorder %s34, 1
    %p532 = por %p530, %p531
    %p534 = scmp.ne.s32.totalorder %s519, %s533
    %p535 = scmp.eq.s32.totalorder %s34, 0
    %p536 = por %p534, %p535
    %s538 = sadd.s32 %s537, 1
    %p541 = scmp.eq.s32.totalorder %s28, 1
    %p542 = scmp.ne.s32.totalorder %s537, %s539
    %p543 = scmp.eq.s32.totalorder %s28, 0
    %p544 = por %p542, %p543
    %p545 = scmp.ne.s32.totalorder %s537, %s539
    %p546 = scmp.eq.s32.totalorder %s33, 1
    %p547 = por %p545, %p546
    %p548 = scmp.ne.s32.totalorder %s539, %s540
    %p549 = scmp.eq.s32.totalorder %s33, 0
    %p550 = por %p548, %p549
    %p551 = scmp.ne.s32.totalorder %s539, %s540
    %p552 = scmp.eq.s32.totalorder %s34, 1
    %p553 = por %p551, %p552
    %p555 = scmp.ne.s32.totalorder %s540, %s554
    %p556 = scmp.eq.s32.totalorder %s34, 0
    %p557 = por %p555, %p556
    %p558 = scmp.le.s32.totalorder 1, %s28
    %p559 = scmp.lt.s32.totalorder %s28, 3
    %p560 = pnand %p558, %p559
    %p561 = pneg %p560
    // Predicated region
    $region9: #{_lambda_.1} parent=5 // pred_check
      _
    $region10: #{_lambda_.1} parent=5 // pred_check_branch
      %563 = sbr.rel (%p560) target = $region12
    $region11: #{_lambda_.1} parent=5 // pred_region
      %s564 = ssub.s32 %s28, 1
      // Predicated region
      $region13: #{_lambda_.1} parent=11 // pred_check
        %p565 = pneg %p49
      $region14: #{_lambda_.1} parent=11 // pred_check_branch
        %567 = sbr.rel (%p565) target = $region16
      $region15: #{_lambda_.1} parent=11 // pred_region
        _
      $region16: #{_lambda_.1} parent=11 // pred_fallthru
        _
      // Predicated region
      $region17: #{_lambda_.1} parent=11 // pred_check
        %p568 = pneg %p70
      $region18: #{_lambda_.1} parent=11 // pred_check_branch
        %570 = sbr.rel (%p568) target = $region20
      $region19: #{_lambda_.1} parent=11 // pred_region
        _
      $region20: #{_lambda_.1} parent=11 // pred_fallthru
        _
      // Predicated region
      $region21: #{_lambda_.1} parent=11 // pred_check
        %p571 = pneg %p403
      $region22: #{_lambda_.1} parent=11 // pred_check_branch
        %573 = sbr.rel (%p571) target = $region24
      $region23: #{_lambda_.1} parent=11 // pred_region
        _
      $region24: #{_lambda_.1} parent=11 // pred_fallthru
        _
      // Predicated region
      $region25: #{_lambda_.1} parent=11 // pred_check
        %p574 = pneg %p424
      $region26: #{_lambda_.1} parent=11 // pred_check_branch
        %576 = sbr.rel (%p574) target = $region28
      $region27: #{_lambda_.1} parent=11 // pred_region
        _
      $region28: #{_lambda_.1} parent=11 // pred_fallthru
        _
      // Predicated region
      $region29: #{_lambda_.1} parent=11 // pred_check
        %p577 = pneg %p445
      $region30: #{_lambda_.1} parent=11 // pred_check_branch
        %579 = sbr.rel (%p577) target = $region32
      $region31: #{_lambda_.1} parent=11 // pred_region
        _
      $region32: #{_lambda_.1} parent=11 // pred_fallthru
        _
      // Predicated region
      $region33: #{_lambda_.1} parent=11 // pred_check
        %p580 = pneg %p466
      $region34: #{_lambda_.1} parent=11 // pred_check_branch
        %582 = sbr.rel (%p580) target = $region36
      $region35: #{_lambda_.1} parent=11 // pred_region
        _
      $region36: #{_lambda_.1} parent=11 // pred_fallthru
        _
      // Predicated region
      $region37: #{_lambda_.1} parent=11 // pred_check
        %p583 = pneg %p487
      $region38: #{_lambda_.1} parent=11 // pred_check_branch
        %585 = sbr.rel (%p583) target = $region40
      $region39: #{_lambda_.1} parent=11 // pred_region
        _
      $region40: #{_lambda_.1} parent=11 // pred_fallthru
        _
      // Predicated region
      $region41: #{_lambda_.1} parent=11 // pred_check
        %p586 = pneg %p508
      $region42: #{_lambda_.1} parent=11 // pred_check_branch
        %588 = sbr.rel (%p586) target = $region44
      $region43: #{_lambda_.1} parent=11 // pred_region
        _
      $region44: #{_lambda_.1} parent=11 // pred_fallthru
        _
    $region12: #{_lambda_.1} parent=5 // pred_fallthru
      _
    %p589 = scmp.lt.s32.totalorder %s28, 2
    // Predicated region
    $region45: #{_lambda_.1} parent=5 // pred_check
      %p590 = pneg %p589
    $region46: #{_lambda_.1} parent=5 // pred_check_branch
      %592 = sbr.rel (%p590) target = $region48
    $region47: #{_lambda_.1} parent=5 // pred_region
      // Predicated region
      $region49: #{_lambda_.1} parent=47 // pred_check
        %p593 = pneg %p90
      $region50: #{_lambda_.1} parent=47 // pred_check_branch
        %595 = sbr.rel (%p593) target = $region52
      $region51: #{_lambda_.1} parent=47 // pred_region
        %p596 = scmp.lt.s32.totalorder %s28, 1
        %s597 = scalar_select %p596, %s28, 1
        %s598 = smul.addr %s597, 4
        %s599 = smul.addr %s598, 4
        %s600 = scalar_lea.vmem %s2, %s599
      $region52: #{_lambda_.1} parent=47 // pred_fallthru
        _
      // Predicated region
      $region53: #{_lambda_.1} parent=47 // pred_check
        %p601 = pneg %p116
      $region54: #{_lambda_.1} parent=47 // pred_check_branch
        %603 = sbr.rel (%p601) target = $region56
      $region55: #{_lambda_.1} parent=47 // pred_region
        %p604 = scmp.lt.s32.totalorder %s28, 1
        %s605 = scalar_select %p604, %s28, 1
        %s606 = scalar_lea.vmem %s3, %s605
      $region56: #{_lambda_.1} parent=47 // pred_fallthru
        _
      // Predicated region
      $region57: #{_lambda_.1} parent=47 // pred_check
        %p607 = pneg %p142
      $region58: #{_lambda_.1} parent=47 // pred_check_branch
        %609 = sbr.rel (%p607) target = $region60
      $region59: #{_lambda_.1} parent=47 // pred_region
        %p610 = scmp.lt.s32.totalorder %s28, 1
        %s611 = scalar_select %p610, %s28, 1
        %s612 = smul.addr %s611, 4
        %s613 = smul.addr %s612, 4
        %s614 = scalar_lea.vmem %s4, %s613
      $region60: #{_lambda_.1} parent=47 // pred_fallthru
        _
      // Predicated region
      $region61: #{_lambda_.1} parent=47 // pred_check
        %p615 = pneg %p168
      $region62: #{_lambda_.1} parent=47 // pred_check_branch
        %617 = sbr.rel (%p615) target = $region64
      $region63: #{_lambda_.1} parent=47 // pred_region
        %p618 = scmp.lt.s32.totalorder %s28, 1
        %s619 = scalar_select %p618, %s28, 1
        %s620 = scalar_lea.vmem %s5, %s619
      $region64: #{_lambda_.1} parent=47 // pred_fallthru
        _
      // Predicated region
      $region65: #{_lambda_.1} parent=47 // pred_check
        %p621 = pneg %p194
      $region66: #{_lambda_.1} parent=47 // pred_check_branch
        %623 = sbr.rel (%p621) target = $region68
      $region67: #{_lambda_.1} parent=47 // pred_region
        %p624 = scmp.lt.s32.totalorder %s28, 1
        %s625 = scalar_select %p624, %s28, 1
        %s626 = scalar_lea.vmem %s6, %s625
      $region68: #{_lambda_.1} parent=47 // pred_fallthru
        _
      // Predicated region
      $region69: #{_lambda_.1} parent=47 // pred_check
        %p627 = pneg %p220
      $region70: #{_lambda_.1} parent=47 // pred_check_branch
        %629 = sbr.rel (%p627) target = $region72
      $region71: #{_lambda_.1} parent=47 // pred_region
        %p630 = scmp.lt.s32.totalorder %s28, 1
        %s631 = scalar_select %p630, %s28, 1
        %s632 = scalar_lea.vmem %s7, %s631
      $region72: #{_lambda_.1} parent=47 // pred_fallthru
        _
      // Predicated region
      $region73: #{_lambda_.1} parent=47 // pred_check
        %p633 = pneg %p246
      $region74: #{_lambda_.1} parent=47 // pred_check_branch
        %635 = sbr.rel (%p633) target = $region76
      $region75: #{_lambda_.1} parent=47 // pred_region
        %p636 = scmp.lt.s32.totalorder %s28, 1
        %s637 = scalar_select %p636, %s28, 1
        %s638 = smul.addr %s637, 4
        %s639 = smul.addr %s638, 4
        %s640 = scalar_lea.vmem %s8, %s639
      $region76: #{_lambda_.1} parent=47 // pred_fallthru
        _
      // Predicated region
      $region77: #{_lambda_.1} parent=47 // pred_check
        %p641 = pneg %p272
      $region78: #{_lambda_.1} parent=47 // pred_check_branch
        %643 = sbr.rel (%p641) target = $region80
      $region79: #{_lambda_.1} parent=47 // pred_region
        %p644 = scmp.lt.s32.totalorder %s28, 1
        %s645 = scalar_select %p644, %s28, 1
        %s646 = scalar_lea.vmem %s9, %s645
      $region80: #{_lambda_.1} parent=47 // pred_fallthru
        _
      // Predicated region
      $region81: #{_lambda_.1} parent=47 // pred_check
        %p647 = pneg %p298
      $region82: #{_lambda_.1} parent=47 // pred_check_branch
        %649 = sbr.rel (%p647) target = $region84
      $region83: #{_lambda_.1} parent=47 // pred_region
        %p650 = scmp.lt.s32.totalorder %s28, 1
        %s651 = scalar_select %p650, %s28, 1
        %s652 = smul.addr %s651, 8
        %s653 = smul.addr %s652, 4
        %s654 = scalar_lea.vmem %s10, %s653
      $region84: #{_lambda_.1} parent=47 // pred_fallthru
        _
      // Predicated region
      $region85: #{_lambda_.1} parent=47 // pred_check
        %p655 = pneg %p324
      $region86: #{_lambda_.1} parent=47 // pred_check_branch
        %657 = sbr.rel (%p655) target = $region88
      $region87: #{_lambda_.1} parent=47 // pred_region
        %p658 = scmp.lt.s32.totalorder %s28, 1
        %s659 = scalar_select %p658, %s28, 1
        %s660 = scalar_lea.vmem %s11, %s659
      $region88: #{_lambda_.1} parent=47 // pred_fallthru
        _
      // Predicated region
      $region89: #{_lambda_.1} parent=47 // pred_check
        %p661 = pneg %p350
      $region90: #{_lambda_.1} parent=47 // pred_check_branch
        %663 = sbr.rel (%p661) target = $region92
      $region91: #{_lambda_.1} parent=47 // pred_region
        %p664 = scmp.lt.s32.totalorder %s28, 1
        %s665 = scalar_select %p664, %s28, 1
        %s666 = scalar_lea.vmem %s12, %s665
      $region92: #{_lambda_.1} parent=47 // pred_fallthru
        _
      // Predicated region
      $region93: #{_lambda_.1} parent=47 // pred_check
        %p667 = pneg %p376
      $region94: #{_lambda_.1} parent=47 // pred_check_branch
        %669 = sbr.rel (%p667) target = $region96
      $region95: #{_lambda_.1} parent=47 // pred_region
        %p670 = scmp.lt.s32.totalorder %s28, 1
        %s671 = scalar_select %p670, %s28, 1
        %s672 = scalar_lea.vmem %s13, %s671
      $region96: #{_lambda_.1} parent=47 // pred_fallthru
        _
    $region48: #{_lambda_.1} parent=5 // pred_fallthru
      _
    %p673 = scmp.le.s32.totalorder 1, %s28
    %p674 = scmp.lt.s32.totalorder %s28, 3
    %p675 = pnand %p673, %p674
    %p676 = pneg %p675
    // Predicated region
    $region97: #{_lambda_.1} parent=5 // pred_check
      _
    $region98: #{_lambda_.1} parent=5 // pred_check_branch
      %678 = sbr.rel (%p675) target = $region100
    $region99: #{_lambda_.1} parent=5 // pred_region
      %s679 = ssub.s32 %s28, 1
      %p680 = pneg %p49
      %p681 = pneg %p46
      %p682 = pneg %p70
      %p683 = pneg %p67
      %p684 = scmp.lt.s32.totalorder %s33, 1
      %s685 = scalar_select %p684, %s33, 1
      %s686 = smul.addr %s685, 4
      %s687 = smul.addr %s686, 4
      %s688 = scalar_lea.vmem %s2, %s687
      %p689 = pneg %p96
      %p690 = pneg %p93
      %p691 = scmp.lt.s32.totalorder %s33, 1
      %s692 = scalar_select %p691, %s33, 1
      %s693 = scalar_lea.vmem %s3, %s692
      %p694 = pneg %p122
      %p695 = pneg %p119
      %p696 = scmp.lt.s32.totalorder %s33, 1
      %s697 = scalar_select %p696, %s33, 1
      %s698 = smul.addr %s697, 4
      %s699 = smul.addr %s698, 4
      %s700 = scalar_lea.vmem %s4, %s699
      %p701 = pneg %p148
      %p702 = pneg %p145
      %p703 = scmp.lt.s32.totalorder %s33, 1
      %s704 = scalar_select %p703, %s33, 1
      %s705 = scalar_lea.vmem %s5, %s704
      %p706 = pneg %p174
      %p707 = pneg %p171
      %p708 = scmp.lt.s32.totalorder %s33, 1
      %s709 = scalar_select %p708, %s33, 1
      %s710 = scalar_lea.vmem %s6, %s709
      %p711 = pneg %p200
      %p712 = pneg %p197
      %p713 = scmp.lt.s32.totalorder %s33, 1
      %s714 = scalar_select %p713, %s33, 1
      %s715 = scalar_lea.vmem %s7, %s714
      %p716 = pneg %p226
      %p717 = pneg %p223
      %p718 = scmp.lt.s32.totalorder %s33, 1
      %s719 = scalar_select %p718, %s33, 1
      %s720 = smul.addr %s719, 4
      %s721 = smul.addr %s720, 4
      %s722 = scalar_lea.vmem %s8, %s721
      %p723 = pneg %p252
      %p724 = pneg %p249
      %p725 = scmp.lt.s32.totalorder %s33, 1
      %s726 = scalar_select %p725, %s33, 1
      %s727 = scalar_lea.vmem %s9, %s726
      %p728 = pneg %p278
      %p729 = pneg %p275
      %p730 = scmp.lt.s32.totalorder %s33, 1
      %s731 = scalar_select %p730, %s33, 1
      %s732 = smul.addr %s731, 8
      %s733 = smul.addr %s732, 4
      %s734 = scalar_lea.vmem %s10, %s733
      %p735 = pneg %p304
      %p736 = pneg %p301
      %p737 = scmp.lt.s32.totalorder %s33, 1
      %s738 = scalar_select %p737, %s33, 1
      %s739 = scalar_lea.vmem %s11, %s738
      %p740 = pneg %p330
      %p741 = pneg %p327
      %p742 = scmp.lt.s32.totalorder %s33, 1
      %s743 = scalar_select %p742, %s33, 1
      %s744 = scalar_lea.vmem %s12, %s743
      %p745 = pneg %p356
      %p746 = pneg %p353
      %p747 = scmp.lt.s32.totalorder %s33, 1
      %s748 = scalar_select %p747, %s33, 1
      %s749 = scalar_lea.vmem %s13, %s748
      %p750 = pneg %p382
      %p751 = pneg %p379
      %p752 = pneg %p403
      %p753 = pneg %p400
      %p754 = pneg %p424
      %p755 = pneg %p421
      %p756 = pneg %p445
      %p757 = pneg %p442
      %p758 = pneg %p466
      %p759 = pneg %p463
      %p760 = pneg %p487
      %p761 = pneg %p484
      %p762 = pneg %p508
      %p763 = pneg %p505
      %p764 = pneg %p529
      %p765 = pneg %p526
      %p766 = pneg %p550
      %p767 = pneg %p547
      %p768 = scmp.lt.s32.totalorder %s33, 1
      %s769 = scalar_select %p768, %s33, 1
      %s770 = smul.addr %s769, 4
      %s771 = smul.addr %s770, 4
      %s772 = scalar_lea.vmem %s2, %s771
      %p773 = scmp.lt.s32.totalorder %s33, 1
      %s774 = scalar_select %p773, %s33, 1
      %s775 = scalar_lea.vmem %s3, %s774
      %p776 = scmp.lt.s32.totalorder %s33, 1
      %s777 = scalar_select %p776, %s33, 1
      %s778 = smul.addr %s777, 4
      %s779 = smul.addr %s778, 4
      %s780 = scalar_lea.vmem %s4, %s779
      %p781 = scmp.lt.s32.totalorder %s33, 1
      %s782 = scalar_select %p781, %s33, 1
      %s783 = scalar_lea.vmem %s5, %s782
      %p784 = scmp.lt.s32.totalorder %s33, 1
      %s785 = scalar_select %p784, %s33, 1
      %s786 = scalar_lea.vmem %s6, %s785
      %p787 = scmp.lt.s32.totalorder %s33, 1
      %s788 = scalar_select %p787, %s33, 1
      %s789 = scalar_lea.vmem %s7, %s788
      %p790 = scmp.lt.s32.totalorder %s33, 1
      %s791 = scalar_select %p790, %s33, 1
      %s792 = smul.addr %s791, 4
      %s793 = smul.addr %s792, 4
      %s794 = scalar_lea.vmem %s8, %s793
      %p795 = scmp.lt.s32.totalorder %s33, 1
      %s796 = scalar_select %p795, %s33, 1
      %s797 = scalar_lea.vmem %s9, %s796
      %p798 = scmp.lt.s32.totalorder %s33, 1
      %s799 = scalar_select %p798, %s33, 1
      %s800 = smul.addr %s799, 8
      %s801 = smul.addr %s800, 4
      %s802 = scalar_lea.vmem %s10, %s801
      %p803 = scmp.lt.s32.totalorder %s33, 1
      %s804 = scalar_select %p803, %s33, 1
      %s805 = scalar_lea.vmem %s11, %s804
      %p806 = scmp.lt.s32.totalorder %s33, 1
      %s807 = scalar_select %p806, %s33, 1
      %s808 = scalar_lea.vmem %s12, %s807
      %p809 = scmp.lt.s32.totalorder %s33, 1
      %s810 = scalar_select %p809, %s33, 1
      %s811 = scalar_lea.vmem %s13, %s810
      %p813 = scmp.eq.s32.totalorder %s33, 0
      // Predicated region
      $region101: #{_lambda_.1} parent=99 // pred_check
        %p814 = pneg %p813
      $region102: #{_lambda_.1} parent=99 // pred_check_branch
        %816 = sbr.rel (%p814) target = $region104
      $region103: #{_lambda_.1} parent=99 // pred_region
        %v817 = vld [vmem:[%s0] sm:$0xff]
        %v818 = vld [vmem:[%s0 + $0x8] sm:$0xff]
        %vm819 = vcmask 261120
        %820 = vst.msk [vmem:[#allocation2] sm:$0xff] %vm819, %v817
        %821 = vst.msk [vmem:[#allocation2 + $0x8] sm:$0xff] %vm819, %v818
      $region104: #{_lambda_.1} parent=99 // pred_fallthru
        _
      %v822 = vld [vmem:[#allocation2] sm:$0xff]
      %v823 = vld [vmem:[#allocation2 + $0x8] sm:$0xff]
      %v824 = vpack.c.bf16 %v823, %v822
      %v825 = vld [vmem:[%s772] sm:$0xf]
      %v826 = vld [vmem:[%s772 + $0x4] sm:$0xf]
      %v827 = vld [vmem:[%s772 + $0x8] sm:$0xf]
      %v828 = vld [vmem:[%s772 + $0xc] sm:$0xf]
      %v829 = vld [vmem:[%s775] sm:$0x1]
      %v831 = vperm.slane %v829, 0
      %v837 = vunpack.c.l.b16 %v825
      %v838 = vunpack.c.l.b16 %v826
      %v839 = vunpack.c.l.b16 %v827
      %v840 = vunpack.c.l.b16 %v828
      %v841 = vpack.c.b16 %v838, %v837
      %v842 = vpack.c.b16 %v840, %v839
      %vm845 = vcmask 261120
      %v847 = vsel %vm845, %v824, 0
      %849 = vmatpush.bf16.msra.mxu0 0
      %850 = vmatpush.bf16.msra.mxu0 0
      %851 = vmatpush.bf16.msra.mxu0 0
      %852 = vmatpush.bf16.msra.mxu0 0
      %853 = vmatpush.bf16.msra.mxu0 0
      %854 = vmatpush.bf16.msra.mxu0 0
      %855 = vmatpush.bf16.msra.mxu0 %v842
      %856 = vmatpush.bf16.msra.mxu0 %v841
      %857 = vmatmul.bf16.gmra.mxu0 %v847
      %v858 = vpop.f32.mrf.mxu0
      %v859 = vadd.f32 %v831, %v858
      %v860 = vpop.f32.mrf.mxu0
      %v861 = vadd.f32 %v831, %v860
      %862 = vdwg.mxu0
      %v863 = vld [vmem:[%s1] sm:$0x3]
      %v865 = vrot.slane %v863, 1
      %v866 = vpack.c.bf16 %v859, %v859
      %v867 = vpack.c.bf16 %v861, %v861
      %v869 = vunpack.c.l.b16 %v866
      %v870 = vpack.c.b16 %v869, %v869
      %871 = vrot.lane.b32.xlu0 %v870, 96
      %v872 = vpop.permute.xlu0 %871
      %vm873 = vcmask 64512
      %v875 = vsel %vm873, %v866, 0
      %v878 = vsel %vm873, %v872, 0
      %880 = vmatpush.bf16.xpose.msra.mxu0 0
      %881 = vmatpush.bf16.xpose.msra.mxu0 0
      %882 = vmatpush.bf16.xpose.msra.mxu0 0
      %883 = vmatpush.bf16.xpose.msra.mxu0 0
      %884 = vmatpush.bf16.xpose.msra.mxu0 0
      %885 = vmatpush.bf16.xpose.msra.mxu0 0
      %886 = vmatpush.bf16.xpose.msra.mxu0 0
      %887 = vmatpush.bf16.xpose.msra.mxu0 %v878
      %888 = vmatmul.bf16.gmra.mxu0 %v875
      %v889 = vpop.f32.mrf.mxu0
      %v890 = vadd.f32 0.0, %v889
      %v891 = vpop.f32.mrf.mxu0
      %892 = vdwg.mxu0
      %v894 = vunpack.c.l.b16 %v867
      %v895 = vpack.c.b16 %v894, %v894
      %896 = vrot.lane.b32.xlu0 %v895, 96
      %v897 = vpop.permute.xlu0 %896
      %v899 = vsel %vm873, %v867, 0
      %v902 = vsel %vm873, %v897, 0
      %904 = vmatpush.bf16.xpose.msra.mxu0 0
      %905 = vmatpush.bf16.xpose.msra.mxu0 0
      %906 = vmatpush.bf16.xpose.msra.mxu0 0
      %907 = vmatpush.bf16.xpose.msra.mxu0 0
      %908 = vmatpush.bf16.xpose.msra.mxu0 0
      %909 = vmatpush.bf16.xpose.msra.mxu0 0
      %910 = vmatpush.bf16.xpose.msra.mxu0 0
      %911 = vmatpush.bf16.xpose.msra.mxu0 %v902
      %912 = vmatmul.bf16.gmra.mxu0 %v899
      %v913 = vpop.f32.mrf.mxu0
      %v914 = vadd.f32 0.0, %v913
      %v915 = vpop.f32.mrf.mxu0
      %916 = vdwg.mxu0
      %v917 = vmul.f32 %v890, 0.35355338
      %v918 = vmul.f32 %v914, 0.35355338
      %v919 = vperm.slane %v863, 0
      %v920 = vperm.slane %v865, 0
      %v923 = vadd.f32 %v917, %v919
      %v924 = vadd.f32 %v918, %v920
      %v925 = vsel %vm873, %v923, -inf
      %926 = vmax.xlane.f32.xlu0 %v925
      %v927 = vpop.xlane.xlu0 %926
      %v928 = vsel %vm873, %v924, -inf
      %929 = vmax.xlane.f32.xlu0 %v928
      %v930 = vpop.xlane.xlu0 %929
      %v931 = vsub.f32 %v923, %v927
      %v932 = vsub.f32 %v924, %v930
      %v933 = vmul.f32 %v931, 1.442695
      %v934 = vpow.pop %v933
      %v935 = vmul.f32 %v932, 1.442695
      %v936 = vpow.pop %v935
      %v937 = vsel %vm873, %v934, 0.0
      %938 = vadd.xlane.f32.xlu0 %v937
      %v939 = vpop.xlane.xlu0 %938
      %v940 = vsel %vm873, %v936, 0.0
      %941 = vadd.xlane.f32.xlu0 %v940
      %v942 = vpop.xlane.xlu0 %941
      %v943 = vrcp.pop %v939
      %v944 = vrcp.pop %v942
      %v945 = vmul.f32 %v934, %v943
      %v946 = vmul.f32 %v936, %v944
      %v947 = vpack.c.bf16 %v945, %v945
      %v948 = vpack.c.bf16 %v946, %v946
      %949 = vrot.lane.b32.xlu0 %v870, 64
      %v950 = vpop.permute.xlu0 %949
      %v952 = vsel %vm873, %v947, 0
      %vm954 = vcmask 1043456
      %v956 = vsel %vm954, %v950, 0
      %958 = vmatpush.bf16.msra.mxu0 0
      %959 = vmatpush.bf16.msra.mxu0 0
      %960 = vmatpush.bf16.msra.mxu0 0
      %961 = vmatpush.bf16.msra.mxu0 0
      %962 = vmatpush.bf16.msra.mxu0 0
      %963 = vmatpush.bf16.msra.mxu0 0
      %964 = vmatpush.bf16.msra.mxu0 0
      %965 = vmatpush.bf16.msra.mxu0 %v956
      %966 = vmatmul.bf16.gmra.mxu0 %v952
      %v967 = vpop.f32.mrf.mxu0
      %v968 = vadd.f32 0.0, %v967
      %v969 = vpop.f32.mrf.mxu0
      %970 = vdwg.mxu0
      %971 = vrot.lane.b32.xlu0 %v895, 64
      %v972 = vpop.permute.xlu0 %971
      %v974 = vsel %vm873, %v948, 0
      %v977 = vsel %vm954, %v972, 0
      %979 = vmatpush.bf16.msra.mxu0 0
      %980 = vmatpush.bf16.msra.mxu0 0
      %981 = vmatpush.bf16.msra.mxu0 0
      %982 = vmatpush.bf16.msra.mxu0 0
      %983 = vmatpush.bf16.msra.mxu0 0
      %984 = vmatpush.bf16.msra.mxu0 0
      %985 = vmatpush.bf16.msra.mxu0 0
      %986 = vmatpush.bf16.msra.mxu0 %v977
      %987 = vmatmul.bf16.gmra.mxu0 %v974
      %v988 = vpop.f32.mrf.mxu0
      %v989 = vadd.f32 0.0, %v988
      %v990 = vpop.f32.mrf.mxu0
      %991 = vdwg.mxu0
      %992 = vrot.lane.b32.xlu0 %v870, 120
      %v993 = vpop.permute.xlu0 %992
      %994 = vrot.lane.b32.xlu0 %v870, 88
      %v995 = vpop.permute.xlu0 %994
      %v997 = vsel %vm873, %v993, 0
      %v1000 = vsel %vm873, %v995, 0
      %1002 = vmatpush.bf16.xpose.msra.mxu0 0
      %1003 = vmatpush.bf16.xpose.msra.mxu0 0
      %1004 = vmatpush.bf16.xpose.msra.mxu0 0
      %1005 = vmatpush.bf16.xpose.msra.mxu0 0
      %1006 = vmatpush.bf16.xpose.msra.mxu0 0
      %1007 = vmatpush.bf16.xpose.msra.mxu0 0
      %1008 = vmatpush.bf16.xpose.msra.mxu0 0
      %1009 = vmatpush.bf16.xpose.msra.mxu0 %v1000
      %1010 = vmatmul.bf16.gmra.mxu0 %v997
      %v1011 = vpop.f32.mrf.mxu0
      %v1012 = vadd.f32 0.0, %v1011
      %v1013 = vpop.f32.mrf.mxu0
      %1014 = vdwg.mxu0
      %1015 = vrot.lane.b32.xlu0 %v895, 120
      %v1016 = vpop.permute.xlu0 %1015
      %1017 = vrot.lane.b32.xlu0 %v895, 88
      %v1018 = vpop.permute.xlu0 %1017
      %v1020 = vsel %vm873, %v1016, 0
      %v1023 = vsel %vm873, %v1018, 0
      %1025 = vmatpush.bf16.xpose.msra.mxu0 0
      %1026 = vmatpush.bf16.xpose.msra.mxu0 0
      %1027 = vmatpush.bf16.xpose.msra.mxu0 0
      %1028 = vmatpush.bf16.xpose.msra.mxu0 0
      %1029 = vmatpush.bf16.xpose.msra.mxu0 0
      %1030 = vmatpush.bf16.xpose.msra.mxu0 0
      %1031 = vmatpush.bf16.xpose.msra.mxu0 0
      %1032 = vmatpush.bf16.xpose.msra.mxu0 %v1023
      %1033 = vmatmul.bf16.gmra.mxu0 %v1020
      %v1034 = vpop.f32.mrf.mxu0
      %v1035 = vadd.f32 0.0, %v1034
      %v1036 = vpop.f32.mrf.mxu0
      %1037 = vdwg.mxu0
      %v1038 = vmul.f32 %v1012, 0.35355338
      %v1039 = vmul.f32 %v1035, 0.35355338
      %v1040 = vadd.f32 %v1038, %v919
      %v1041 = vadd.f32 %v1039, %v920
      %v1042 = vsel %vm873, %v1040, -inf
      %1043 = vmax.xlane.f32.xlu0 %v1042
      %v1044 = vpop.xlane.xlu0 %1043
      %v1045 = vsel %vm873, %v1041, -inf
      %1046 = vmax.xlane.f32.xlu0 %v1045
      %v1047 = vpop.xlane.xlu0 %1046
      %v1048 = vsub.f32 %v1040, %v1044
      %v1049 = vsub.f32 %v1041, %v1047
      %v1050 = vmul.f32 %v1048, 1.442695
      %v1051 = vpow.pop %v1050
      %v1052 = vmul.f32 %v1049, 1.442695
      %v1053 = vpow.pop %v1052
      %v1054 = vsel %vm873, %v1051, 0.0
      %1055 = vadd.xlane.f32.xlu0 %v1054
      %v1056 = vpop.xlane.xlu0 %1055
      %v1057 = vsel %vm873, %v1053, 0.0
      %1058 = vadd.xlane.f32.xlu0 %v1057
      %v1059 = vpop.xlane.xlu0 %1058
      %v1060 = vrcp.pop %v1056
      %v1061 = vrcp.pop %v1059
      %v1062 = vmul.f32 %v1051, %v1060
      %v1063 = vmul.f32 %v1053, %v1061
      %v1064 = vpack.c.bf16 %v1062, %v1062
      %v1065 = vpack.c.bf16 %v1063, %v1063
      %1066 = vrot.lane.b32.xlu0 %v870, 56
      %v1067 = vpop.permute.xlu0 %1066
      %v1069 = vsel %vm873, %v1064, 0
      %v1072 = vsel %vm954, %v1067, 0
      %1074 = vmatpush.bf16.msra.mxu0 0
      %1075 = vmatpush.bf16.msra.mxu0 0
      %1076 = vmatpush.bf16.msra.mxu0 0
      %1077 = vmatpush.bf16.msra.mxu0 0
      %1078 = vmatpush.bf16.msra.mxu0 0
      %1079 = vmatpush.bf16.msra.mxu0 0
      %1080 = vmatpush.bf16.msra.mxu0 0
      %1081 = vmatpush.bf16.msra.mxu0 %v1072
      %1082 = vmatmul.bf16.gmra.mxu0 %v1069
      %v1083 = vpop.f32.mrf.mxu0
      %v1084 = vadd.f32 0.0, %v1083
      %v1085 = vpop.f32.mrf.mxu0
      %1086 = vdwg.mxu0
      %1087 = vrot.lane.b32.xlu0 %v895, 56
      %v1088 = vpop.permute.xlu0 %1087
      %v1090 = vsel %vm873, %v1065, 0
      %v1093 = vsel %vm954, %v1088, 0
      %1095 = vmatpush.bf16.msra.mxu0 0
      %1096 = vmatpush.bf16.msra.mxu0 0
      %1097 = vmatpush.bf16.msra.mxu0 0
      %1098 = vmatpush.bf16.msra.mxu0 0
      %1099 = vmatpush.bf16.msra.mxu0 0
      %1100 = vmatpush.bf16.msra.mxu0 0
      %1101 = vmatpush.bf16.msra.mxu0 0
      %1102 = vmatpush.bf16.msra.mxu0 %v1093
      %1103 = vmatmul.bf16.gmra.mxu0 %v1090
      %v1104 = vpop.f32.mrf.mxu0
      %v1105 = vadd.f32 0.0, %v1104
      %v1106 = vpop.f32.mrf.mxu0
      %1107 = vdwg.mxu0
      %1108 = vrot.lane.b32.xlu0 %v870, 112
      %v1109 = vpop.permute.xlu0 %1108
      %1110 = vrot.lane.b32.xlu0 %v870, 80
      %v1111 = vpop.permute.xlu0 %1110
      %v1113 = vsel %vm873, %v1109, 0
      %v1116 = vsel %vm873, %v1111, 0
      %1118 = vmatpush.bf16.xpose.msra.mxu0 0
      %1119 = vmatpush.bf16.xpose.msra.mxu0 0
      %1120 = vmatpush.bf16.xpose.msra.mxu0 0
      %1121 = vmatpush.bf16.xpose.msra.mxu0 0
      %1122 = vmatpush.bf16.xpose.msra.mxu0 0
      %1123 = vmatpush.bf16.xpose.msra.mxu0 0
      %1124 = vmatpush.bf16.xpose.msra.mxu0 0
      %1125 = vmatpush.bf16.xpose.msra.mxu0 %v1116
      %1126 = vmatmul.bf16.gmra.mxu0 %v1113
      %v1127 = vpop.f32.mrf.mxu0
      %v1128 = vadd.f32 0.0, %v1127
      %v1129 = vpop.f32.mrf.mxu0
      %1130 = vdwg.mxu0
      %1131 = vrot.lane.b32.xlu0 %v895, 112
      %v1132 = vpop.permute.xlu0 %1131
      %1133 = vrot.lane.b32.xlu0 %v895, 80
      %v1134 = vpop.permute.xlu0 %1133
      %v1136 = vsel %vm873, %v1132, 0
      %v1139 = vsel %vm873, %v1134, 0
      %1141 = vmatpush.bf16.xpose.msra.mxu0 0
      %1142 = vmatpush.bf16.xpose.msra.mxu0 0
      %1143 = vmatpush.bf16.xpose.msra.mxu0 0
      %1144 = vmatpush.bf16.xpose.msra.mxu0 0
      %1145 = vmatpush.bf16.xpose.msra.mxu0 0
      %1146 = vmatpush.bf16.xpose.msra.mxu0 0
      %1147 = vmatpush.bf16.xpose.msra.mxu0 0
      %1148 = vmatpush.bf16.xpose.msra.mxu0 %v1139
      %1149 = vmatmul.bf16.gmra.mxu0 %v1136
      %v1150 = vpop.f32.mrf.mxu0
      %v1151 = vadd.f32 0.0, %v1150
      %v1152 = vpop.f32.mrf.mxu0
      %1153 = vdwg.mxu0
      %v1154 = vmul.f32 %v1128, 0.35355338
      %v1155 = vmul.f32 %v1151, 0.35355338
      %v1156 = vadd.f32 %v1154, %v919
      %v1157 = vadd.f32 %v1155, %v920
      %v1158 = vsel %vm873, %v1156, -inf
      %1159 = vmax.xlane.f32.xlu0 %v1158
      %v1160 = vpop.xlane.xlu0 %1159
      %v1161 = vsel %vm873, %v1157, -inf
      %1162 = vmax.xlane.f32.xlu0 %v1161
      %v1163 = vpop.xlane.xlu0 %1162
      %v1164 = vsub.f32 %v1156, %v1160
      %v1165 = vsub.f32 %v1157, %v1163
      %v1166 = vmul.f32 %v1164, 1.442695
      %v1167 = vpow.pop %v1166
      %v1168 = vmul.f32 %v1165, 1.442695
      %v1169 = vpow.pop %v1168
      %v1170 = vsel %vm873, %v1167, 0.0
      %1171 = vadd.xlane.f32.xlu0 %v1170
      %v1172 = vpop.xlane.xlu0 %1171
      %v1173 = vsel %vm873, %v1169, 0.0
      %1174 = vadd.xlane.f32.xlu0 %v1173
      %v1175 = vpop.xlane.xlu0 %1174
      %v1176 = vrcp.pop %v1172
      %v1177 = vrcp.pop %v1175
      %v1178 = vmul.f32 %v1167, %v1176
      %v1179 = vmul.f32 %v1169, %v1177
      %v1180 = vpack.c.bf16 %v1178, %v1178
      %v1181 = vpack.c.bf16 %v1179, %v1179
      %1182 = vrot.lane.b32.xlu0 %v870, 48
      %v1183 = vpop.permute.xlu0 %1182
      %v1185 = vsel %vm873, %v1180, 0
      %v1188 = vsel %vm954, %v1183, 0
      %1190 = vmatpush.bf16.msra.mxu0 0
      %1191 = vmatpush.bf16.msra.mxu0 0
      %1192 = vmatpush.bf16.msra.mxu0 0
      %1193 = vmatpush.bf16.msra.mxu0 0
      %1194 = vmatpush.bf16.msra.mxu0 0
      %1195 = vmatpush.bf16.msra.mxu0 0
      %1196 = vmatpush.bf16.msra.mxu0 0
      %1197 = vmatpush.bf16.msra.mxu0 %v1188
      %1198 = vmatmul.bf16.gmra.mxu0 %v1185
      %v1199 = vpop.f32.mrf.mxu0
      %v1200 = vadd.f32 0.0, %v1199
      %v1201 = vpop.f32.mrf.mxu0
      %1202 = vdwg.mxu0
      %1203 = vrot.lane.b32.xlu0 %v895, 48
      %v1204 = vpop.permute.xlu0 %1203
      %v1206 = vsel %vm873, %v1181, 0
      %v1209 = vsel %vm954, %v1204, 0
      %1211 = vmatpush.bf16.msra.mxu0 0
      %1212 = vmatpush.bf16.msra.mxu0 0
      %1213 = vmatpush.bf16.msra.mxu0 0
      %1214 = vmatpush.bf16.msra.mxu0 0
      %1215 = vmatpush.bf16.msra.mxu0 0
      %1216 = vmatpush.bf16.msra.mxu0 0
      %1217 = vmatpush.bf16.msra.mxu0 0
      %1218 = vmatpush.bf16.msra.mxu0 %v1209
      %1219 = vmatmul.bf16.gmra.mxu0 %v1206
      %v1220 = vpop.f32.mrf.mxu0
      %v1221 = vadd.f32 0.0, %v1220
      %v1222 = vpop.f32.mrf.mxu0
      %1223 = vdwg.mxu0
      %1224 = vrot.lane.b32.xlu0 %v870, 104
      %v1225 = vpop.permute.xlu0 %1224
      %1226 = vrot.lane.b32.xlu0 %v870, 72
      %v1227 = vpop.permute.xlu0 %1226
      %v1229 = vsel %vm873, %v1225, 0
      %v1232 = vsel %vm873, %v1227, 0
      %1234 = vmatpush.bf16.xpose.msra.mxu0 0
      %1235 = vmatpush.bf16.xpose.msra.mxu0 0
      %1236 = vmatpush.bf16.xpose.msra.mxu0 0
      %1237 = vmatpush.bf16.xpose.msra.mxu0 0
      %1238 = vmatpush.bf16.xpose.msra.mxu0 0
      %1239 = vmatpush.bf16.xpose.msra.mxu0 0
      %1240 = vmatpush.bf16.xpose.msra.mxu0 0
      %1241 = vmatpush.bf16.xpose.msra.mxu0 %v1232
      %1242 = vmatmul.bf16.gmra.mxu0 %v1229
      %v1243 = vpop.f32.mrf.mxu0
      %v1244 = vadd.f32 0.0, %v1243
      %v1245 = vpop.f32.mrf.mxu0
      %1246 = vdwg.mxu0
      %1247 = vrot.lane.b32.xlu0 %v895, 104
      %v1248 = vpop.permute.xlu0 %1247
      %1249 = vrot.lane.b32.xlu0 %v895, 72
      %v1250 = vpop.permute.xlu0 %1249
      %v1252 = vsel %vm873, %v1248, 0
      %v1255 = vsel %vm873, %v1250, 0
      %1257 = vmatpush.bf16.xpose.msra.mxu0 0
      %1258 = vmatpush.bf16.xpose.msra.mxu0 0
      %1259 = vmatpush.bf16.xpose.msra.mxu0 0
      %1260 = vmatpush.bf16.xpose.msra.mxu0 0
      %1261 = vmatpush.bf16.xpose.msra.mxu0 0
      %1262 = vmatpush.bf16.xpose.msra.mxu0 0
      %1263 = vmatpush.bf16.xpose.msra.mxu0 0
      %1264 = vmatpush.bf16.xpose.msra.mxu0 %v1255
      %1265 = vmatmul.bf16.gmra.mxu0 %v1252
      %v1266 = vpop.f32.mrf.mxu0
      %v1267 = vadd.f32 0.0, %v1266
      %v1268 = vpop.f32.mrf.mxu0
      %1269 = vdwg.mxu0
      %v1270 = vmul.f32 %v1244, 0.35355338
      %v1271 = vmul.f32 %v1267, 0.35355338
      %v1272 = vadd.f32 %v1270, %v919
      %v1273 = vadd.f32 %v1271, %v920
      %v1274 = vsel %vm873, %v1272, -inf
      %1275 = vmax.xlane.f32.xlu0 %v1274
      %v1276 = vpop.xlane.xlu0 %1275
      %v1277 = vsel %vm873, %v1273, -inf
      %1278 = vmax.xlane.f32.xlu0 %v1277
      %v1279 = vpop.xlane.xlu0 %1278
      %v1280 = vsub.f32 %v1272, %v1276
      %v1281 = vsub.f32 %v1273, %v1279
      %v1282 = vmul.f32 %v1280, 1.442695
      %v1283 = vpow.pop %v1282
      %v1284 = vmul.f32 %v1281, 1.442695
      %v1285 = vpow.pop %v1284
      %v1286 = vsel %vm873, %v1283, 0.0
      %1287 = vadd.xlane.f32.xlu0 %v1286
      %v1288 = vpop.xlane.xlu0 %1287
      %v1289 = vsel %vm873, %v1285, 0.0
      %1290 = vadd.xlane.f32.xlu0 %v1289
      %v1291 = vpop.xlane.xlu0 %1290
      %v1292 = vrcp.pop %v1288
      %v1293 = vrcp.pop %v1291
      %v1294 = vmul.f32 %v1283, %v1292
      %v1295 = vmul.f32 %v1285, %v1293
      %v1296 = vpack.c.bf16 %v1294, %v1294
      %v1297 = vpack.c.bf16 %v1295, %v1295
      %1298 = vrot.lane.b32.xlu0 %v870, 40
      %v1299 = vpop.permute.xlu0 %1298
      %v1301 = vsel %vm873, %v1296, 0
      %v1304 = vsel %vm954, %v1299, 0
      %1306 = vmatpush.bf16.msra.mxu0 0
      %1307 = vmatpush.bf16.msra.mxu0 0
      %1308 = vmatpush.bf16.msra.mxu0 0
      %1309 = vmatpush.bf16.msra.mxu0 0
      %1310 = vmatpush.bf16.msra.mxu0 0
      %1311 = vmatpush.bf16.msra.mxu0 0
      %1312 = vmatpush.bf16.msra.mxu0 0
      %1313 = vmatpush.bf16.msra.mxu0 %v1304
      %1314 = vmatmul.bf16.gmra.mxu0 %v1301
      %v1315 = vpop.f32.mrf.mxu0
      %v1316 = vadd.f32 0.0, %v1315
      %v1317 = vpop.f32.mrf.mxu0
      %1318 = vdwg.mxu0
      %1319 = vrot.lane.b32.xlu0 %v895, 40
      %v1320 = vpop.permute.xlu0 %1319
      %v1322 = vsel %vm873, %v1297, 0
      %v1325 = vsel %vm954, %v1320, 0
      %1327 = vmatpush.bf16.msra.mxu0 0
      %1328 = vmatpush.bf16.msra.mxu0 0
      %1329 = vmatpush.bf16.msra.mxu0 0
      %1330 = vmatpush.bf16.msra.mxu0 0
      %1331 = vmatpush.bf16.msra.mxu0 0
      %1332 = vmatpush.bf16.msra.mxu0 0
      %1333 = vmatpush.bf16.msra.mxu0 0
      %1334 = vmatpush.bf16.msra.mxu0 %v1325
      %1335 = vmatmul.bf16.gmra.mxu0 %v1322
      %v1336 = vpop.f32.mrf.mxu0
      %v1337 = vadd.f32 0.0, %v1336
      %v1338 = vpop.f32.mrf.mxu0
      %1339 = vdwg.mxu0
      %1342 = vrot.lane.b32.xlu0 %v1084, 8
      %v1343 = vpop.permute.xlu0 %1342
      %1344 = vrot.lane.b32.xlu0 %v1105, 8
      %v1345 = vpop.permute.xlu0 %1344
      %1350 = vrot.lane.b32.xlu0 %v1200, 16
      %v1351 = vpop.permute.xlu0 %1350
      %1352 = vrot.lane.b32.xlu0 %v1221, 16
      %v1353 = vpop.permute.xlu0 %1352
      %1358 = vrot.lane.b32.xlu0 %v1316, 24
      %v1359 = vpop.permute.xlu0 %1358
      %1360 = vrot.lane.b32.xlu0 %v1337, 24
      %v1361 = vpop.permute.xlu0 %1360
      %v1364 = vsel %vm873, %v968, %v1343
      %v1365 = vsel %vm873, %v989, %v1345
      %vm1366 = vcmask 130048
      %v1367 = vsel %vm1366, %v1364, %v1351
      %v1368 = vsel %vm1366, %v1365, %v1353
      %vm1369 = vcmask 195584
      %v1370 = vsel %vm1369, %v1367, %v1359
      %v1371 = vsel %vm1369, %v1368, %v1361
      %v1372 = vpack.c.bf16 %v1371, %v1370
      %v1373 = vld [vmem:[%s780] sm:$0xf]
      %v1374 = vld [vmem:[%s780 + $0x4] sm:$0xf]
      %v1375 = vld [vmem:[%s780 + $0x8] sm:$0xf]
      %v1376 = vld [vmem:[%s780 + $0xc] sm:$0xf]
      %v1377 = vld [vmem:[%s783] sm:$0x1]
      %v1379 = vperm.slane %v1377, 0
      %v1385 = vunpack.c.l.b16 %v1373
      %v1386 = vunpack.c.l.b16 %v1374
      %v1387 = vunpack.c.l.b16 %v1375
      %v1388 = vunpack.c.l.b16 %v1376
      %v1389 = vpack.c.b16 %v1386, %v1385
      %v1390 = vpack.c.b16 %v1388, %v1387
      %v1394 = vsel %vm845, %v1372, 0
      %1396 = vmatpush.bf16.msra.mxu0 0
      %1397 = vmatpush.bf16.msra.mxu0 0
      %1398 = vmatpush.bf16.msra.mxu0 0
      %1399 = vmatpush.bf16.msra.mxu0 0
      %1400 = vmatpush.bf16.msra.mxu0 0
      %1401 = vmatpush.bf16.msra.mxu0 0
      %1402 = vmatpush.bf16.msra.mxu0 %v1390
      %1403 = vmatpush.bf16.msra.mxu0 %v1389
      %1404 = vmatmul.bf16.gmra.mxu0 %v1394
      %v1405 = vpop.f32.mrf.mxu0
      %v1406 = vadd.f32 %v1379, %v1405
      %v1407 = vpop.f32.mrf.mxu0
      %v1408 = vadd.f32 %v1379, %v1407
      %1409 = vdwg.mxu0
      %v1410 = vadd.f32 %v822, %v1406
      %v1411 = vadd.f32 %v823, %v1408
      %v1412 = vld [vmem:[%s786] sm:$0x1]
      %v1413 = vld [vmem:[%s789] sm:$0x1]
      %v1414 = vsel %vm845, %v1410, 0.0
      %1415 = vadd.xlane.f32.xlu0 %v1414
      %v1416 = vpop.xlane.xlu0 %1415
      %v1417 = vsel %vm845, %v1411, 0.0
      %1418 = vadd.xlane.f32.xlu0 %v1417
      %v1419 = vpop.xlane.xlu0 %1418
      %v1420 = vrcp.pop 32.0
      %v1421 = vmul.f32 32.0, %v1420
      %v1422 = vsub.f32 1.0, %v1421
      %v1423 = vmul.f32 %v1420, %v1422
      %v1424 = vadd.f32 %v1420, %v1423
      %vm1425 = vweird.f32 %v1420
      %v1426 = vsel %vm1425, %v1420, %v1424
      %v1427 = vmul.f32 %v1416, %v1426
      %v1428 = vmul.f32 %v1419, %v1426
      %v1429 = vsub.f32 %v1410, %v1427
      %v1430 = vsub.f32 %v1411, %v1428
      %v1431 = vmul.f32 %v1429, %v1429
      %v1432 = vmul.f32 %v1430, %v1430
      %v1433 = vsel %vm845, %v1431, 0.0
      %1434 = vadd.xlane.f32.xlu0 %v1433
      %v1435 = vpop.xlane.xlu0 %1434
      %v1436 = vsel %vm845, %v1432, 0.0
      %1437 = vadd.xlane.f32.xlu0 %v1436
      %v1438 = vpop.xlane.xlu0 %1437
      %v1439 = vmul.f32 %v1435, %v1426
      %v1440 = vmul.f32 %v1438, %v1426
      %v1441 = vadd.f32 %v1439, 1e-12
      %v1442 = vadd.f32 %v1440, 1e-12
      %v1443 = vrsqrt.pop %v1441
      %v1444 = vmul.f32 %v1443, %v1441
      %v1445 = vmul.f32 %v1444, %v1443
      %v1446 = vmul.f32 0.5, %v1445
      %v1447 = vsub.f32 1.5, %v1446
      %v1448 = vmul.f32 %v1443, %v1447
      %vm1449 = vweird.f32 %v1441
      %vm1450 = vweird.f32 %v1443
      %vm1451 = vmor %vm1449, %vm1450
      %v1452 = vsel %vm1451, %v1443, %v1448
      %v1453 = vrsqrt.pop %v1442
      %v1454 = vmul.f32 %v1453, %v1442
      %v1455 = vmul.f32 %v1454, %v1453
      %v1456 = vmul.f32 0.5, %v1455
      %v1457 = vsub.f32 1.5, %v1456
      %v1458 = vmul.f32 %v1453, %v1457
      %vm1459 = vweird.f32 %v1442
      %vm1460 = vweird.f32 %v1453
      %vm1461 = vmor %vm1459, %vm1460
      %v1462 = vsel %vm1461, %v1453, %v1458
      %v1463 = vmul.f32 %v1429, %v1452
      %v1464 = vmul.f32 %v1430, %v1462
      %v1466 = vperm.slane %v1412, 0
      %v1468 = vmul.f32 %v1463, %v1466
      %v1469 = vmul.f32 %v1464, %v1466
      %v1471 = vperm.slane %v1413, 0
      %v1473 = vadd.f32 %v1468, %v1471
      %v1474 = vadd.f32 %v1469, %v1471
      %v1475 = vpack.c.bf16 %v1474, %v1473
      %v1476 = vld [vmem:[%s794] sm:$0xf]
      %v1477 = vld [vmem:[%s794 + $0x4] sm:$0xf]
      %v1478 = vld [vmem:[%s794 + $0x8] sm:$0xf]
      %v1479 = vld [vmem:[%s794 + $0xc] sm:$0xf]
      %v1480 = vld [vmem:[%s797] sm:$0x1]
      %v1482 = vperm.slane %v1480, 0
      %v1488 = vunpack.c.l.b16 %v1476
      %v1489 = vunpack.c.l.b16 %v1477
      %v1490 = vunpack.c.l.b16 %v1478
      %v1491 = vunpack.c.l.b16 %v1479
      %v1492 = vpack.c.b16 %v1489, %v1488
      %v1493 = vpack.c.b16 %v1491, %v1490
      %v1497 = vsel %vm845, %v1475, 0
      %1499 = vmatpush.bf16.msra.mxu0 0
      %1500 = vmatpush.bf16.msra.mxu0 0
      %1501 = vmatpush.bf16.msra.mxu0 0
      %1502 = vmatpush.bf16.msra.mxu0 0
      %1503 = vmatpush.bf16.msra.mxu0 0
      %1504 = vmatpush.bf16.msra.mxu0 0
      %1505 = vmatpush.bf16.msra.mxu0 %v1493
      %1506 = vmatpush.bf16.msra.mxu0 %v1492
      %1507 = vmatmul.bf16.gmra.mxu0 %v1497
      %v1508 = vpop.f32.mrf.mxu0
      %v1509 = vadd.f32 %v1482, %v1508
      %v1510 = vpop.f32.mrf.mxu0
      %v1511 = vadd.f32 %v1482, %v1510
      %1512 = vdwg.mxu0
      %v1513 = vmul.f32 %v1509, %v1509
      %v1514 = vmul.f32 %v1511, %v1511
      %v1515 = vmul.f32 %v1509, %v1513
      %v1516 = vmul.f32 %v1511, %v1514
      %v1517 = vmul.f32 %v1515, 0.044715
      %v1518 = vmul.f32 %v1516, 0.044715
      %v1519 = vadd.f32 %v1509, %v1517
      %v1520 = vadd.f32 %v1511, %v1518
      %v1521 = vmul.f32 %v1519, 0.7978846
      %v1522 = vmul.f32 %v1520, 0.7978846
      %v1523 = vtanh.pop %v1521
      %v1524 = vtanh.pop %v1522
      %v1525 = vadd.f32 %v1523, 1.0
      %v1526 = vadd.f32 %v1524, 1.0
      %v1527 = vmul.f32 %v1525, 0.5
      %v1528 = vmul.f32 %v1526, 0.5
      %v1529 = vmul.f32 %v1509, %v1527
      %v1530 = vmul.f32 %v1511, %v1528
      %v1531 = vpack.c.bf16 %v1530, %v1529
      %v1532 = vld [vmem:[%s802] sm:$0xf]
      %v1533 = vld [vmem:[%s802 + $0x4] sm:$0xf]
      %v1534 = vld [vmem:[%s802 + $0x8] sm:$0xf]
      %v1535 = vld [vmem:[%s802 + $0xc] sm:$0xf]
      %v1536 = vld [vmem:[%s802 + $0x10] sm:$0xf]
      %v1537 = vld [vmem:[%s802 + $0x14] sm:$0xf]
      %v1538 = vld [vmem:[%s802 + $0x18] sm:$0xf]
      %v1539 = vld [vmem:[%s802 + $0x1c] sm:$0xf]
      %v1540 = vld [vmem:[%s805] sm:$0x1]
      %v1542 = vperm.slane %v1540, 0
      %v1552 = vunpack.c.l.b16 %v1532
      %v1553 = vunpack.c.l.b16 %v1533
      %v1554 = vunpack.c.l.b16 %v1534
      %v1555 = vunpack.c.l.b16 %v1535
      %v1556 = vunpack.c.l.b16 %v1536
      %v1557 = vunpack.c.l.b16 %v1537
      %v1558 = vunpack.c.l.b16 %v1538
      %v1559 = vunpack.c.l.b16 %v1539
      %v1560 = vpack.c.b16 %v1553, %v1552
      %v1561 = vpack.c.b16 %v1555, %v1554
      %v1562 = vpack.c.b16 %v1557, %v1556
      %v1563 = vpack.c.b16 %v1559, %v1558
      %vm1568 = vcmask 523264
      %v1570 = vsel %vm1568, %v1531, 0
      %1572 = vmatpush.bf16.msra.mxu0 0
      %1573 = vmatpush.bf16.msra.mxu0 0
      %1574 = vmatpush.bf16.msra.mxu0 0
      %1575 = vmatpush.bf16.msra.mxu0 0
      %1576 = vmatpush.bf16.msra.mxu0 %v1563
      %1577 = vmatpush.bf16.msra.mxu0 %v1562
      %1578 = vmatpush.bf16.msra.mxu0 %v1561
      %1579 = vmatpush.bf16.msra.mxu0 %v1560
      %1580 = vmatmul.bf16.gmra.mxu0 %v1570
      %v1581 = vpop.f32.mrf.mxu0
      %v1582 = vadd.f32 %v1542, %v1581
      %v1583 = vpop.f32.mrf.mxu0
      %v1584 = vadd.f32 %v1542, %v1583
      %1585 = vdwg.mxu0
      %v1586 = vadd.f32 %v1473, %v1582
      %v1587 = vadd.f32 %v1474, %v1584
      %v1588 = vld [vmem:[%s808] sm:$0x1]
      %v1589 = vld [vmem:[%s811] sm:$0x1]
      %v1590 = vsel %vm845, %v1586, 0.0
      %1591 = vadd.xlane.f32.xlu0 %v1590
      %v1592 = vpop.xlane.xlu0 %1591
      %v1593 = vsel %vm845, %v1587, 0.0
      %1594 = vadd.xlane.f32.xlu0 %v1593
      %v1595 = vpop.xlane.xlu0 %1594
      %v1596 = vmul.f32 %v1592, %v1426
      %v1597 = vmul.f32 %v1595, %v1426
      %v1598 = vsub.f32 %v1586, %v1596
      %v1599 = vsub.f32 %v1587, %v1597
      %v1600 = vmul.f32 %v1598, %v1598
      %v1601 = vmul.f32 %v1599, %v1599
      %v1602 = vsel %vm845, %v1600, 0.0
      %1603 = vadd.xlane.f32.xlu0 %v1602
      %v1604 = vpop.xlane.xlu0 %1603
      %v1605 = vsel %vm845, %v1601, 0.0
      %1606 = vadd.xlane.f32.xlu0 %v1605
      %v1607 = vpop.xlane.xlu0 %1606
      %v1608 = vmul.f32 %v1604, %v1426
      %v1609 = vmul.f32 %v1607, %v1426
      %v1610 = vadd.f32 %v1608, 1e-12
      %v1611 = vadd.f32 %v1609, 1e-12
      %v1612 = vrsqrt.pop %v1610
      %v1613 = vmul.f32 %v1612, %v1610
      %v1614 = vmul.f32 %v1613, %v1612
      %v1615 = vmul.f32 0.5, %v1614
      %v1616 = vsub.f32 1.5, %v1615
      %v1617 = vmul.f32 %v1612, %v1616
      %vm1618 = vweird.f32 %v1610
      %vm1619 = vweird.f32 %v1612
      %vm1620 = vmor %vm1618, %vm1619
      %v1621 = vsel %vm1620, %v1612, %v1617
      %v1622 = vrsqrt.pop %v1611
      %v1623 = vmul.f32 %v1622, %v1611
      %v1624 = vmul.f32 %v1623, %v1622
      %v1625 = vmul.f32 0.5, %v1624
      %v1626 = vsub.f32 1.5, %v1625
      %v1627 = vmul.f32 %v1622, %v1626
      %vm1628 = vweird.f32 %v1611
      %vm1629 = vweird.f32 %v1622
      %vm1630 = vmor %vm1628, %vm1629
      %v1631 = vsel %vm1630, %v1622, %v1627
      %v1632 = vmul.f32 %v1598, %v1621
      %v1633 = vmul.f32 %v1599, %v1631
      %v1635 = vperm.slane %v1588, 0
      %v1637 = vmul.f32 %v1632, %v1635
      %v1638 = vmul.f32 %v1633, %v1635
      %v1640 = vperm.slane %v1589, 0
      %v1642 = vadd.f32 %v1637, %v1640
      %v1643 = vadd.f32 %v1638, %v1640
      %1644 = vst.msk [vmem:[#allocation2] sm:$0xff] %vm845, %v1642
      %1645 = vst.msk [vmem:[#allocation2 + $0x8] sm:$0xff] %vm845, %v1643
      %p1646 = scmp.eq.s32.totalorder %s33, 1
      // Predicated region
      $region105: #{_lambda_.1} parent=99 // pred_check
        %p1647 = pneg %p1646
      $region106: #{_lambda_.1} parent=99 // pred_check_branch
        %1649 = sbr.rel (%p1647) target = $region108
      $region107: #{_lambda_.1} parent=99 // pred_region
        %v1650 = vld [vmem:[#allocation2] ss:$8 sm:$0x3]
        %v1651 = vld [vmem:[%s14] sm:$0xff]
        %v1652 = vld [vmem:[%s14 + $0x8] sm:$0xff]
        %v1653 = vld [vmem:[%s14 + $0x10] sm:$0xff]
        %v1654 = vld [vmem:[%s14 + $0x18] sm:$0xff]
        %v1655 = vld [vmem:[%s15] sm:$0x1]
        %v1657 = vperm.slane %v1655, 0
        %v1660 = vsel %vm845, %v1650, 0
        %1662 = vmatpush.msra.mxu0 0.0
        %1663 = vmatpush.msra.mxu0 0.0
        %1664 = vmatpush.msra.mxu0 0.0
        %1665 = vmatpush.msra.mxu0 0.0
        %1666 = vmatpush.msra.mxu0 0.0
        %1667 = vmatpush.msra.mxu0 0.0
        %1668 = vmatpush.msra.mxu0 0.0
        %1669 = vmatpush.msra.mxu0 0.0
        %1670 = vmatpush.msra.mxu0 0.0
        %1671 = vmatpush.msra.mxu0 0.0
        %1672 = vmatpush.msra.mxu0 0.0
        %1673 = vmatpush.msra.mxu0 0.0
        %1674 = vmatpush.msra.mxu0 %v1654
        %1675 = vmatpush.msra.mxu0 %v1653
        %1676 = vmatpush.msra.mxu0 %v1652
        %1677 = vmatpush.msra.mxu0 %v1651
        %1678 = vmatmul.f32.gmra.mxu0 %v1660
        %v1679 = vpop.f32.mrf.mxu0
        %v1680 = vadd.f32 %v1657, %v1679
        %1681 = vdwg.mxu0
        %v1682 = vtanh.pop %v1680
        %v1683 = vld [vmem:[%s16] sm:$0xff]
        %v1684 = vld [vmem:[%s16 + $0x8] sm:$0xff]
        %v1685 = vld [vmem:[%s16 + $0x10] sm:$0xff]
        %v1686 = vld [vmem:[%s16 + $0x18] sm:$0xff]
        %v1687 = vld [vmem:[%s17] sm:$0x1]
        %v1689 = vperm.slane %v1687, 0
        %v1692 = vsel %vm845, %v1682, 0
        %1694 = vmatpush.msra.mxu0 0.0
        %1695 = vmatpush.msra.mxu0 0.0
        %1696 = vmatpush.msra.mxu0 0.0
        %1697 = vmatpush.msra.mxu0 0.0
        %1698 = vmatpush.msra.mxu0 0.0
        %1699 = vmatpush.msra.mxu0 0.0
        %1700 = vmatpush.msra.mxu0 0.0
        %1701 = vmatpush.msra.mxu0 0.0
        %1702 = vmatpush.msra.mxu0 0.0
        %1703 = vmatpush.msra.mxu0 0.0
        %1704 = vmatpush.msra.mxu0 0.0
        %1705 = vmatpush.msra.mxu0 0.0
        %1706 = vmatpush.msra.mxu0 %v1686
        %1707 = vmatpush.msra.mxu0 %v1685
        %1708 = vmatpush.msra.mxu0 %v1684
        %1709 = vmatpush.msra.mxu0 %v1683
        %1710 = vmatmul.f32.gmra.mxu0 %v1692
        %v1711 = vpop.f32.mrf.mxu0
        %v1712 = vadd.f32 %v1689, %v1711
        %1713 = vdwg.mxu0
        %1714 = vst [vmem:[%s20] sm:$0x3] %v1712
        %v1715 = vld [vmem:[%s18] sm:$0xff]
        %v1716 = vld [vmem:[%s18 + $0x8] sm:$0xff]
        %v1717 = vld [vmem:[%s18 + $0x10] sm:$0xff]
        %v1718 = vld [vmem:[%s18 + $0x18] sm:$0xff]
        %v1719 = vld [vmem:[%s18 + $0x20] sm:$0xff]
        %v1720 = vld [vmem:[%s18 + $0x28] sm:$0xff]
        %v1721 = vld [vmem:[%s18 + $0x30] sm:$0xff]
        %v1722 = vld [vmem:[%s18 + $0x38] sm:$0xff]
        %v1723 = vld [vmem:[%s18 + $0x40] sm:$0xff]
        %v1724 = vld [vmem:[%s18 + $0x48] sm:$0xff]
        %v1725 = vld [vmem:[%s18 + $0x50] sm:$0xff]
        %v1726 = vld [vmem:[%s18 + $0x58] sm:$0xff]
        %v1727 = vld [vmem:[%s18 + $0x60] sm:$0xff]
        %v1728 = vld [vmem:[%s18 + $0x68] sm:$0xff]
        %v1729 = vld [vmem:[%s18 + $0x70] sm:$0xff]
        %v1730 = vld [vmem:[%s18 + $0x78] sm:$0xff]
        %v1731 = vld [vmem:[%s19] sm:$0x1]
        %v1733 = vperm.slane %v1731, 0
        %1735 = vmatpush.msra.mxu0 %v1730
        %1736 = vmatpush.msra.mxu0 %v1729
        %1737 = vmatpush.msra.mxu0 %v1728
        %1738 = vmatpush.msra.mxu0 %v1727
        %1739 = vmatpush.msra.mxu0 %v1726
        %1740 = vmatpush.msra.mxu0 %v1725
        %1741 = vmatpush.msra.mxu0 %v1724
        %1742 = vmatpush.msra.mxu0 %v1723
        %1743 = vmatpush.msra.mxu0 %v1722
        %1744 = vmatpush.msra.mxu0 %v1721
        %1745 = vmatpush.msra.mxu0 %v1720
        %1746 = vmatpush.msra.mxu0 %v1719
        %1747 = vmatpush.msra.mxu0 %v1718
        %1748 = vmatpush.msra.mxu0 %v1717
        %1749 = vmatpush.msra.mxu0 %v1716
        %1750 = vmatpush.msra.mxu0 %v1715
        %1751 = vmatmul.f32.gmra.mxu0 %v1712
        %v1752 = vpop.f32.mrf.mxu0
        %v1753 = vadd.f32 %v1733, %v1752
        %1754 = vdwg.mxu0
        %1755 = vst [vmem:[%s21] sm:$0x3] %v1753
      $region108: #{_lambda_.1} parent=99 // pred_fallthru
        _
      // Predicated region
      $region109: #{_lambda_.1} parent=99 // pred_check
        %p1756 = pneg %p526
      $region110: #{_lambda_.1} parent=99 // pred_check_branch
        %1758 = sbr.rel (%p1756) target = $region112
      $region111: #{_lambda_.1} parent=99 // pred_region
        _
      $region112: #{_lambda_.1} parent=99 // pred_fallthru
        _
      // Predicated region
      $region113: #{_lambda_.1} parent=99 // pred_check
        %p1759 = pneg %p547
      $region114: #{_lambda_.1} parent=99 // pred_check_branch
        %1761 = sbr.rel (%p1759) target = $region116
      $region115: #{_lambda_.1} parent=99 // pred_region
        _
      $region116: #{_lambda_.1} parent=99 // pred_fallthru
        _
      // Predicated region
      $region117: #{_lambda_.1} parent=99 // pred_check
        %p1762 = pneg %p526
      $region118: #{_lambda_.1} parent=99 // pred_check_branch
        %1764 = sbr.rel (%p1762) target = $region120
      $region119: #{_lambda_.1} parent=99 // pred_region
        _
      $region120: #{_lambda_.1} parent=99 // pred_fallthru
        _
      // Predicated region
      $region121: #{_lambda_.1} parent=99 // pred_check
        %p1765 = pneg %p547
      $region122: #{_lambda_.1} parent=99 // pred_check_branch
        %1767 = sbr.rel (%p1765) target = $region124
      $region123: #{_lambda_.1} parent=99 // pred_region
        _
      $region124: #{_lambda_.1} parent=99 // pred_fallthru
        _
    $region100: #{_lambda_.1} parent=5 // pred_fallthru
      _
    %p1768 = scmp.le.s32.totalorder 2, %s28
    // Predicated region
    $region125: #{_lambda_.1} parent=5 // pred_check
      %p1769 = pneg %p1768
    $region126: #{_lambda_.1} parent=5 // pred_check_branch
      %1771 = sbr.rel (%p1769) target = $region128
    $region127: #{_lambda_.1} parent=5 // pred_region
      %s1772 = ssub.s32 %s28, 2
    $region128: #{_lambda_.1} parent=5 // pred_fallthru
      _
  $region6: #{_lambda_.1} parent=0 // loop_footer
    %s32 = sadd.s32 1, %s28
  $region7: #{_lambda_.1} parent=0 // loop_footer_branch
    %27 = sbr.rel target = $region3
  $region8: #{_lambda_.1} parent=0 // loop_exit
    _

</llo_original>
